<compile_context>
chip_gen: v5e
topology: v5e:2x2
jax: 0.10.0
libtpu: 0.0.40
codegen_flags: <defaults>
</compile_context>

<pallas_src>
import functools
import math

import jax
import jax.numpy as jnp
import numpy as np
from jax.experimental import pallas as pl
from jax.experimental.pallas import tpu as pltpu


# ----------------------------------------------------------------------------------------------
# Kernel
# ----------------------------------------------------------------------------------------------
def encoder_block_kernel(n_heads, eps,
                         # scalar-prefetch (SMEM)
                         lens_ref,                 # (B,)   int32   per-batch key length
                         # inputs
                         ln_ref,                   # (4,)   f32     [alpha1, bias1, alpha2, bias2]
                         x_ref,                    # (1, S, D)      f32
                         wqkv_ref, bqkv_ref,       # (D, 3D) bf16, (1, 3D) f32   (scale folded into q cols)
                         wo_ref, bo_ref,           # (D, D)  bf16, (1, D)  f32
                         w1_ref, b1_ref,           # (D, dff) bf16, (1, dff) f32
                         w2_ref, b2_ref,           # (dff, D) bf16, (1, D)  f32
                         out_ref):                 # (1, S, D)
    """One batch element per grid step."""
    x = x_ref[0]                                   # (S, D) f32
    S, D = x.shape
    H = n_heads
    dk = D // H
    bf16 = jnp.bfloat16

    a1, c1, a2, c2 = ln_ref[0], ln_ref[1], ln_ref[2], ln_ref[3]

    def layer_norm(t, alpha, bias):
        # torch .std() is unbiased (divides by N-1); eps is added to std (not inside sqrt).
        mean = jnp.mean(t, axis=-1, keepdims=True)
        cen = t - mean
        var = jnp.sum(cen * cen, axis=-1, keepdims=True) * (1.0 / (D - 1))
        return alpha * cen / (jnp.sqrt(var) + eps) + bias

    # ---- residual connection 0: pre-norm -> multi-head self-attention -> add ----
    h = layer_norm(x, a1, c1).astype(bf16)

    # Fused lane-dense QKV projection: one (S, D) @ (D, 3D) MXU matmul, f32 accumulation.
    qkv = jnp.dot(h, wqkv_ref[...], preferred_element_type=jnp.float32) + bqkv_ref[...]
    q = qkv[:, :D].astype(bf16)                    # 1/sqrt(dk) already folded into wqkv / bqkv
    k = qkv[:, D:2 * D].astype(bf16)
    v = qkv[:, 2 * D:].astype(bf16)

    # Rebuild the key-padding mask from the prefetched key length (masked_fill_(mask==0, -1e9)).
    klen = lens_ref[pl.program_id(0)]
    col = jax.lax.broadcasted_iota(jnp.int32, (S, S), 1)
    valid = col < klen                             # (S, S)

    # Per-head attention (static lane slices; contraction depth dk is inherent to attention).
    # TODO(synk): at production S, tile queries (grid axis) and stream K/V flash-style so the
    # (S, S) score tile is never fully resident (needed for v7x's 64 MiB VMEM).
    heads = []
    for hh in range(H):
        lo, hi = hh * dk, (hh + 1) * dk
        qh, kh, vh = q[:, lo:hi], k[:, lo:hi], v[:, lo:hi]
        s = jnp.einsum("qd,kd->qk", qh, kh, preferred_element_type=jnp.float32)   # (S, S)
        s = jnp.where(valid, s, -1e9)
        m = jnp.max(s, axis=-1, keepdims=True)
        e = jnp.exp(s - m)
        p = e * (1.0 / jnp.sum(e, axis=-1, keepdims=True))                        # exact softmax
        heads.append(jnp.dot(p.astype(bf16), vh, preferred_element_type=jnp.float32))

    # Head-concat then one lane-dense output projection against Wo in its natural (D, D) layout.
    o = jnp.concatenate(heads, axis=-1).astype(bf16)                               # (S, D)
    attn = jnp.dot(o, wo_ref[...], preferred_element_type=jnp.float32) + bo_ref[...]
    # TODO(synk): dropout layers are identity (eval-mode semantics), not translated stochastically.
    x1 = x + attn

    # ---- residual connection 1: pre-norm -> feed-forward -> add ----
    # TODO(synk): at production dff, keep w1/w2 in HBM (memory_space=pl.ANY) and stream dff-chunks
    # with pltpu.emit_pipeline instead of keeping the (S, dff) activation fully VMEM-resident.
    h2 = layer_norm(x1, a2, c2).astype(bf16)
    ff = jnp.dot(h2, w1_ref[...], preferred_element_type=jnp.float32) + b1_ref[...]
    ff = jnp.maximum(ff, 0.0).astype(bf16)
    ff = jnp.dot(ff, w2_ref[...], preferred_element_type=jnp.float32) + b2_ref[...]
    out_ref[0] = (x1 + ff).astype(out_ref.dtype)


# ----------------------------------------------------------------------------------------------
# Host-side wrapper
# ----------------------------------------------------------------------------------------------
def prepare_params(params, n_heads):
    """Free host-side weight prep: fuse QKV, fold 1/sqrt(dk) into Wq/bq, cast MXU operands to bf16."""
    bf16, f32 = jnp.bfloat16, jnp.float32
    D = params["wq"].shape[0]
    dk = D // n_heads
    scale = 1.0 / math.sqrt(dk)
    wqkv = jnp.concatenate([params["wq"] * scale, params["wk"], params["wv"]], axis=1).astype(bf16)
    bqkv = jnp.concatenate([params["bq"] * scale, params["bk"], params["bv"]], axis=1).astype(f32)
    return {
        "wqkv": wqkv, "bqkv": bqkv,
        "wo": params["wo"].astype(bf16), "bo": params["bo"].astype(f32),
        "w1": params["w1"].astype(bf16), "b1": params["b1"].astype(f32),
        "w2": params["w2"].astype(bf16), "b2": params["b2"].astype(f32),
        "ln": jnp.array([params["alpha1"], params["bias1"],
                         params["alpha2"], params["bias2"]], dtype=f32),
    }


def _vmem_limit_bytes():
    """Generation-aware VMEM request: leave headroom below physical capacity."""
    try:
        cap = getattr(pltpu.get_tpu_info(), "vmem_capacity_bytes", None)
    except Exception:
        cap = None
    if cap is None:
        return 64 * 1024 * 1024
    # v7x (64 MiB): ~48 MiB; v5e/v6e (128 MiB): ~100 MiB.
    return int(min(100 * 1024 * 1024, cap - 16 * 1024 * 1024))


def encoder_block(x, key_lens, params, n_heads, eps=1e-6):
    B, S, D = x.shape
    dff = params["w1"].shape[1]
    prep = prepare_params(params, n_heads)
    lens = key_lens.astype(jnp.int32)

    kern = functools.partial(encoder_block_kernel, n_heads, eps)

    weight_bytes = 2 * (3 * D * D + D * D + 2 * D * dff)
    bias_bytes = 4 * (3 * D + 2 * D + dff)
    cost = pl.CostEstimate(
        flops=int(B * (6 * S * D * D + 4 * S * S * D + 2 * S * D * D + 4 * S * D * dff)),
        transcendentals=int(B * n_heads * S * S),
        bytes_accessed=int(2 * B * S * D * 4 + weight_bytes + bias_bytes + B * 4 + 16),
    )

    def wspec(shape):
        return pl.BlockSpec(shape, lambda b, lens: (0,) * len(shape))

    call = pl.pallas_call(
        kern,
        out_shape=jax.ShapeDtypeStruct((B, S, D), x.dtype),
        grid_spec=pltpu.PrefetchScalarGridSpec(
            num_scalar_prefetch=1,                               # key_lens -> SMEM
            grid=(B,),
            in_specs=[
                pl.BlockSpec(memory_space=pltpu.MemorySpace.SMEM),   # layernorm scalars
                pl.BlockSpec((1, S, D), lambda b, lens: (b, 0, 0)),  # x
                wspec((D, 3 * D)), wspec((1, 3 * D)),                # wqkv, bqkv
                wspec((D, D)), wspec((1, D)),                        # wo, bo
                wspec((D, dff)), wspec((1, dff)),                    # w1, b1
                wspec((dff, D)), wspec((1, D)),                      # w2, b2
            ],
            out_specs=pl.BlockSpec((1, S, D), lambda b, lens: (b, 0, 0)),
        ),
        compiler_params=pltpu.CompilerParams(
            dimension_semantics=("parallel",),                   # batch axis shards across TCs (v7x)
            vmem_limit_bytes=_vmem_limit_bytes(),
        ),
        cost_estimate=cost,
    )
    return call(lens, prep["ln"], x,
                prep["wqkv"], prep["bqkv"], prep["wo"], prep["bo"],
                prep["w1"], prep["b1"], prep["w2"], prep["b2"])


# ----------------------------------------------------------------------------------------------
# References
# ----------------------------------------------------------------------------------------------
def mixed_reference(x, key_lens, prep, n_heads, eps=1e-6):
    """Pure-JAX mirror of the kernel's exact mixed-precision op structure (bf16 MXU, f32 stats)."""
    B, S, D = x.shape
    dk = D // n_heads
    bf16 = jnp.bfloat16
    a1, c1, a2, c2 = prep["ln"][0], prep["ln"][1], prep["ln"][2], prep["ln"][3]

    def ln_(t, a, b):
        m = jnp.mean(t, -1, keepdims=True)
        cen = t - m
        var = jnp.sum(cen * cen, -1, keepdims=True) / (D - 1)
        return a * cen / (jnp.sqrt(var) + eps) + b

    def one(xb, klen):
        h = ln_(xb, a1, c1).astype(bf16)
        qkv = jnp.dot(h, prep["wqkv"], preferred_element_type=jnp.float32) + prep["bqkv"]
        q, k, v = (qkv[:, :D].astype(bf16), qkv[:, D:2 * D].astype(bf16), qkv[:, 2 * D:].astype(bf16))
        valid = jax.lax.broadcasted_iota(jnp.int32, (S, S), 1) < klen
        heads = []
        for hh in range(n_heads):
            lo, hi = hh * dk, (hh + 1) * dk
            s = jnp.einsum("qd,kd->qk", q[:, lo:hi], k[:, lo:hi], preferred_element_type=jnp.float32)
            s = jnp.where(valid, s, -1e9)
            e = jnp.exp(s - jnp.max(s, -1, keepdims=True))
            p = e * (1.0 / jnp.sum(e, -1, keepdims=True))
            heads.append(jnp.dot(p.astype(bf16), v[:, lo:hi], preferred_element_type=jnp.float32))
        o = jnp.concatenate(heads, -1).astype(bf16)
        x1 = xb + jnp.dot(o, prep["wo"], preferred_element_type=jnp.float32) + prep["bo"]
        h2 = ln_(x1, a2, c2).astype(bf16)
        ff = jnp.dot(h2, prep["w1"], preferred_element_type=jnp.float32) + prep["b1"]
        ff = jnp.maximum(ff, 0.0).astype(bf16)
        ff = jnp.dot(ff, prep["w2"], preferred_element_type=jnp.float32) + prep["b2"]
        return x1 + ff

    return jax.vmap(one)(x, key_lens)


def f32_reference(x, key_lens, p, n_heads, eps=1e-6):
    """Exact f32 mirror of the PyTorch EncoderBlock forward (dropout = identity)."""
    def ln(t, a, b):
        m = jnp.mean(t, -1, keepdims=True)
        std = jnp.sqrt(jnp.sum((t - m) ** 2, -1, keepdims=True) / (t.shape[-1] - 1))
        return a * (t - m) / (std + eps) + b

    B, S, D = x.shape
    dk = D // n_heads
    mask = (jnp.arange(S)[None, :] < key_lens[:, None])[:, None, None, :]      # (B,1,1,S) key padding

    h = ln(x, p["alpha1"], p["bias1"])
    q = jnp.dot(h, p["wq"]) + p["bq"]
    k = jnp.dot(h, p["wk"]) + p["bk"]
    v = jnp.dot(h, p["wv"]) + p["bv"]
    split = lambda t: t.reshape(B, S, n_heads, dk).transpose(0, 2, 1, 3)
    q, k, v = split(q), split(k), split(v)
    s = jnp.einsum("bhqd,bhkd->bhqk", q, k) / math.sqrt(dk)
    s = jnp.where(mask, s, -1e9)
    a = jax.nn.softmax(s, axis=-1)
    o = jnp.einsum("bhqk,bhkd->bhqd", a, v).transpose(0, 2, 1, 3).reshape(B, S, D)
    x1 = x + (jnp.dot(o, p["wo"]) + p["bo"])
    h2 = ln(x1, p["alpha2"], p["bias2"])
    ff = jnp.maximum(jnp.dot(h2, p["w1"]) + p["b1"], 0.0)
    ff = jnp.dot(ff, p["w2"]) + p["b2"]
    return x1 + ff


# ----------------------------------------------------------------------------------------------
# Demo / self-check
# ----------------------------------------------------------------------------------------------
if __name__ == "__main__":
    # Small but lane-dense shapes: D multiple of 128 so stores are unmasked full-lane vst.
    B, S, D, H, DFF = 2, 8, 128, 4, 256

    key = jax.random.PRNGKey(0)
    keys = jax.random.split(key, 16)
    f32 = jnp.float32

    # Deterministic synthetic parameters. PyTorch Linear weights are (out, in); stored here
    # pre-transposed as (in, out) so the math is x @ W + b.
    params = {
        "wq": jax.random.normal(keys[0], (D, D), f32) * 0.1,
        "bq": jax.random.normal(keys[1], (1, D), f32) * 0.1,
        "wk": jax.random.normal(keys[2], (D, D), f32) * 0.1,
        "bk": jax.random.normal(keys[3], (1, D), f32) * 0.1,
        "wv": jax.random.normal(keys[4], (D, D), f32) * 0.1,
        "bv": jax.random.normal(keys[5], (1, D), f32) * 0.1,
        "wo": jax.random.normal(keys[6], (D, D), f32) * 0.1,
        "bo": jax.random.normal(keys[7], (1, D), f32) * 0.1,
        "w1": jax.random.normal(keys[8], (D, DFF), f32) * 0.1,
        "b1": jax.random.normal(keys[9], (1, DFF), f32) * 0.1,
        "w2": jax.random.normal(keys[10], (DFF, D), f32) * 0.1,
        "b2": jax.random.normal(keys[11], (1, D), f32) * 0.1,
        # LayerNormalization params (scalar alpha/bias); non-trivial values exercise the affine path.
        "alpha1": 1.1, "bias1": 0.05, "alpha2": 0.9, "bias2": -0.03,
    }

    x = jax.random.normal(keys[12], (B, S, D), f32)
    # Padding-style src_mask: batch 0 attends to all 8 keys, batch 1 to the first 6.
    key_lens = jnp.array([8, 6], dtype=jnp.int32)

    out = encoder_block(x, key_lens, params, n_heads=H)
    out = jax.block_until_ready(out)

    # Primary check: a reference that mirrors the kernel's exact mixed-precision structure.
    prep = prepare_params(params, H)
    ref_mixed = mixed_reference(x, key_lens, prep, n_heads=H)
    np.testing.assert_allclose(np.asarray(out), np.asarray(ref_mixed), rtol=1e-2, atol=1e-2)

    # Sanity bound against the exact f32 module (loose tolerance covers bf16 rounding).
    ref_f32 = f32_reference(x, key_lens, params, n_heads=H)
    np.testing.assert_allclose(np.asarray(out), np.asarray(ref_f32), rtol=1e-1, atol=1.5e-1)

    print("KERNEL_OK")
</pallas_src>

<mosaic_0001>
module attributes {stable_mosaic.version = 11 : i64} {
  func.func @encoder_block_kernel(%arg0: i32, %arg1: memref<2xi32, #tpu.memory_space<smem>>, %arg2: memref<4xf32, #tpu.memory_space<smem>>, %arg3: memref<1x8x128xf32, #tpu.memory_space<vmem>>, %arg4: memref<128x384xbf16, #tpu.memory_space<vmem>>, %arg5: memref<1x384xf32, #tpu.memory_space<vmem>>, %arg6: memref<128x128xbf16, #tpu.memory_space<vmem>>, %arg7: memref<1x128xf32, #tpu.memory_space<vmem>>, %arg8: memref<128x256xbf16, #tpu.memory_space<vmem>>, %arg9: memref<1x256xf32, #tpu.memory_space<vmem>>, %arg10: memref<256x128xbf16, #tpu.memory_space<vmem>>, %arg11: memref<1x128xf32, #tpu.memory_space<vmem>>, %arg12: memref<1x8x128xf32, #tpu.memory_space<vmem>>) attributes {dimension_semantics = [#tpu.dimension_semantics<parallel>], iteration_bounds = array<i64: 2>, scalar_prefetch = 1 : i64, scratch_operands = 0 : i64, tpu.core_type = #tpu.core_type<tc>, window_params = [{transform_indices = @transform_0, window_bounds = array<i64: 4>}, {transform_indices = @transform_1, window_bounds = array<i64: 1, 8, 128>}, {pipeline_mode = #tpu.pipeline_mode<synchronous>, transform_indices = @transform_2, window_bounds = array<i64: 128, 384>}, {pipeline_mode = #tpu.pipeline_mode<synchronous>, transform_indices = @transform_3, window_bounds = array<i64: 1, 384>}, {pipeline_mode = #tpu.pipeline_mode<synchronous>, transform_indices = @transform_4, window_bounds = array<i64: 128, 128>}, {pipeline_mode = #tpu.pipeline_mode<synchronous>, transform_indices = @transform_5, window_bounds = array<i64: 1, 128>}, {pipeline_mode = #tpu.pipeline_mode<synchronous>, transform_indices = @transform_6, window_bounds = array<i64: 128, 256>}, {pipeline_mode = #tpu.pipeline_mode<synchronous>, transform_indices = @transform_7, window_bounds = array<i64: 1, 256>}, {pipeline_mode = #tpu.pipeline_mode<synchronous>, transform_indices = @transform_8, window_bounds = array<i64: 256, 128>}, {pipeline_mode = #tpu.pipeline_mode<synchronous>, transform_indices = @transform_9, window_bounds = array<i64: 1, 128>}, {transform_indices = @transform_10, window_bounds = array<i64: 1, 8, 128>}]} {
    %c0 = arith.constant 0 : index
    %c0_0 = arith.constant 0 : index
    %c0_1 = arith.constant 0 : index
    %0 = vector.load %arg3[%c0, %c0_0, %c0_1] : memref<1x8x128xf32, #tpu.memory_space<vmem>>, vector<1x8x128xf32>
    %1 = vector.shape_cast %0 : vector<1x8x128xf32> to vector<8x128xf32>
    %c0_2 = arith.constant 0 : index
    %2 = memref.load %arg2[%c0_2] : memref<4xf32, #tpu.memory_space<smem>>
    %c1 = arith.constant 1 : index
    %3 = memref.load %arg2[%c1] : memref<4xf32, #tpu.memory_space<smem>>
    %c2 = arith.constant 2 : index
    %4 = memref.load %arg2[%c2] : memref<4xf32, #tpu.memory_space<smem>>
    %c3 = arith.constant 3 : index
    %5 = memref.load %arg2[%c3] : memref<4xf32, #tpu.memory_space<smem>>
    %cst = arith.constant dense<0.000000e+00> : vector<8xf32>
    %6 = vector.multi_reduction <add>, %1, %cst [1] : vector<8x128xf32> to vector<8xf32>
    %7 = vector.shape_cast %6 : vector<8xf32> to vector<8x1xf32>
    %cst_3 = arith.constant 1.280000e+02 : f32
    %8 = vector.broadcast %cst_3 : f32 to vector<8x1xf32>
    %9 = arith.divf %7, %8 : vector<8x1xf32>
    %10 = vector.broadcast %9 : vector<8x1xf32> to vector<8x128xf32>
    %11 = arith.subf %1, %10 : vector<8x128xf32>
    %12 = arith.mulf %11, %11 : vector<8x128xf32>
    %cst_4 = arith.constant dense<0.000000e+00> : vector<8xf32>
    %13 = vector.multi_reduction <add>, %12, %cst_4 [1] : vector<8x128xf32> to vector<8xf32>
    %14 = vector.shape_cast %13 : vector<8xf32> to vector<8x1xf32>
    %cst_5 = arith.constant 0.00787401571 : f32
    %15 = vector.broadcast %cst_5 : f32 to vector<8x1xf32>
    %16 = arith.mulf %14, %15 : vector<8x1xf32>
    %17 = vector.broadcast %2 : f32 to vector<8x128xf32>
    %18 = arith.mulf %17, %11 : vector<8x128xf32>
    %19 = math.sqrt %16 : vector<8x1xf32>
    %cst_6 = arith.constant 9.99999997E-7 : f32
    %20 = vector.broadcast %cst_6 : f32 to vector<8x1xf32>
    %21 = arith.addf %19, %20 : vector<8x1xf32>
    %22 = vector.broadcast %21 : vector<8x1xf32> to vector<8x128xf32>
    %23 = arith.divf %18, %22 : vector<8x128xf32>
    %24 = vector.broadcast %3 : f32 to vector<8x128xf32>
    %25 = arith.addf %23, %24 : vector<8x128xf32>
    %26 = arith.truncf %25 : vector<8x128xf32> to vector<8x128xbf16>
    %c0_7 = arith.constant 0 : index
    %c0_8 = arith.constant 0 : index
    %27 = vector.load %arg4[%c0_7, %c0_8] : memref<128x384xbf16, #tpu.memory_space<vmem>>, vector<128x384xbf16>
    %cst_9 = arith.constant dense<0.000000e+00> : vector<8x384xf32>
    %28 = tpu.matmul %26, %27, %cst_9 {dimension_numbers = #tpu.dot_dimension_numbers<[1], [0], [0], [1], [0, 0, 1, 1], [], []>} : vector<8x128xbf16>, vector<128x384xbf16>, vector<8x384xf32> -> vector<8x384xf32>
    %c0_10 = arith.constant 0 : index
    %c0_11 = arith.constant 0 : index
    %29 = vector.load %arg5[%c0_10, %c0_11] : memref<1x384xf32, #tpu.memory_space<vmem>>, vector<1x384xf32>
    %30 = vector.broadcast %29 : vector<1x384xf32> to vector<8x384xf32>
    %31 = arith.addf %28, %30 : vector<8x384xf32>
    %32 = vector.extract_strided_slice %31 {offsets = [0, 0], sizes = [8, 128], strides = [1, 1]} : vector<8x384xf32> to vector<8x128xf32>
    %33 = arith.truncf %32 : vector<8x128xf32> to vector<8x128xbf16>
    %34 = vector.extract_strided_slice %31 {offsets = [0, 128], sizes = [8, 128], strides = [1, 1]} : vector<8x384xf32> to vector<8x128xf32>
    %35 = arith.truncf %34 : vector<8x128xf32> to vector<8x128xbf16>
    %36 = vector.extract_strided_slice %31 {offsets = [0, 256], sizes = [8, 128], strides = [1, 1]} : vector<8x384xf32> to vector<8x128xf32>
    %37 = arith.truncf %36 : vector<8x128xf32> to vector<8x128xbf16>
    %38 = arith.index_cast %arg0 : i32 to index
    %39 = memref.load %arg1[%38] : memref<2xi32, #tpu.memory_space<smem>>
    %40 = tpu.iota {dimensions = array<i32: 1>} : vector<8x8xi32>
    %41 = vector.broadcast %39 : i32 to vector<8x8xi32>
    %42 = arith.cmpi slt, %40, %41 : vector<8x8xi32>
    %43 = vector.extract_strided_slice %33 {offsets = [0, 0], sizes = [8, 32], strides = [1, 1]} : vector<8x128xbf16> to vector<8x32xbf16>
    %44 = vector.extract_strided_slice %35 {offsets = [0, 0], sizes = [8, 32], strides = [1, 1]} : vector<8x128xbf16> to vector<8x32xbf16>
    %45 = vector.extract_strided_slice %37 {offsets = [0, 0], sizes = [8, 32], strides = [1, 1]} : vector<8x128xbf16> to vector<8x32xbf16>
    "tpu.trace_start"() <{level = 10 : i32, message = "qd,kd->qk"}> : () -> ()
    %cst_12 = arith.constant dense<0.000000e+00> : vector<8x8xf32>
    %46 = tpu.matmul %43, %44, %cst_12 {dimension_numbers = #tpu.dot_dimension_numbers<[1], [1], [0], [0], [0, 0, 1, 0], [], []>} : vector<8x32xbf16>, vector<8x32xbf16>, vector<8x8xf32> -> vector<8x8xf32>
    %cst_13 = arith.constant -1.000000e+09 : f32
    "tpu.trace_stop"() : () -> ()
    %47 = vector.broadcast %cst_13 : f32 to vector<8x8xf32>
    %48 = arith.select %42, %46, %47 : vector<8x8xi1>, vector<8x8xf32>
    %cst_14 = arith.constant dense<0xFF800000> : vector<8xf32>
    %49 = vector.multi_reduction <maximumf>, %48, %cst_14 [1] : vector<8x8xf32> to vector<8xf32>
    %50 = vector.shape_cast %49 : vector<8xf32> to vector<8x1xf32>
    %51 = vector.broadcast %50 : vector<8x1xf32> to vector<8x8xf32>
    %52 = arith.subf %48, %51 : vector<8x8xf32>
    %53 = math.exp %52 : vector<8x8xf32>
    %cst_15 = arith.constant dense<0.000000e+00> : vector<8xf32>
    %54 = vector.multi_reduction <add>, %53, %cst_15 [1] : vector<8x8xf32> to vector<8xf32>
    %55 = vector.shape_cast %54 : vector<8xf32> to vector<8x1xf32>
    %cst_16 = arith.constant 1.000000e+00 : f32
    %56 = vector.broadcast %cst_16 : f32 to vector<8x1xf32>
    %57 = arith.divf %56, %55 : vector<8x1xf32>
    %58 = vector.broadcast %57 : vector<8x1xf32> to vector<8x8xf32>
    %59 = arith.mulf %53, %58 : vector<8x8xf32>
    %60 = arith.truncf %59 : vector<8x8xf32> to vector<8x8xbf16>
    %cst_17 = arith.constant dense<0.000000e+00> : vector<8x32xf32>
    %61 = tpu.matmul %60, %45, %cst_17 {dimension_numbers = #tpu.dot_dimension_numbers<[1], [0], [0], [1], [0, 0, 1, 1], [], []>} : vector<8x8xbf16>, vector<8x32xbf16>, vector<8x32xf32> -> vector<8x32xf32>
    %62 = vector.extract_strided_slice %33 {offsets = [0, 32], sizes = [8, 32], strides = [1, 1]} : vector<8x128xbf16> to vector<8x32xbf16>
    %63 = vector.extract_strided_slice %35 {offsets = [0, 32], sizes = [8, 32], strides = [1, 1]} : vector<8x128xbf16> to vector<8x32xbf16>
    %64 = vector.extract_strided_slice %37 {offsets = [0, 32], sizes = [8, 32], strides = [1, 1]} : vector<8x128xbf16> to vector<8x32xbf16>
    "tpu.trace_start"() <{level = 10 : i32, message = "qd,kd->qk"}> : () -> ()
    %cst_18 = arith.constant dense<0.000000e+00> : vector<8x8xf32>
    %65 = tpu.matmul %62, %63, %cst_18 {dimension_numbers = #tpu.dot_dimension_numbers<[1], [1], [0], [0], [0, 0, 1, 0], [], []>} : vector<8x32xbf16>, vector<8x32xbf16>, vector<8x8xf32> -> vector<8x8xf32>
    %cst_19 = arith.constant -1.000000e+09 : f32
    "tpu.trace_stop"() : () -> ()
    %66 = vector.broadcast %cst_19 : f32 to vector<8x8xf32>
    %67 = arith.select %42, %65, %66 : vector<8x8xi1>, vector<8x8xf32>
    %cst_20 = arith.constant dense<0xFF800000> : vector<8xf32>
    %68 = vector.multi_reduction <maximumf>, %67, %cst_20 [1] : vector<8x8xf32> to vector<8xf32>
    %69 = vector.shape_cast %68 : vector<8xf32> to vector<8x1xf32>
    %70 = vector.broadcast %69 : vector<8x1xf32> to vector<8x8xf32>
    %71 = arith.subf %67, %70 : vector<8x8xf32>
    %72 = math.exp %71 : vector<8x8xf32>
    %cst_21 = arith.constant dense<0.000000e+00> : vector<8xf32>
    %73 = vector.multi_reduction <add>, %72, %cst_21 [1] : vector<8x8xf32> to vector<8xf32>
    %74 = vector.shape_cast %73 : vector<8xf32> to vector<8x1xf32>
    %cst_22 = arith.constant 1.000000e+00 : f32
    %75 = vector.broadcast %cst_22 : f32 to vector<8x1xf32>
    %76 = arith.divf %75, %74 : vector<8x1xf32>
    %77 = vector.broadcast %76 : vector<8x1xf32> to vector<8x8xf32>
    %78 = arith.mulf %72, %77 : vector<8x8xf32>
    %79 = arith.truncf %78 : vector<8x8xf32> to vector<8x8xbf16>
    %cst_23 = arith.constant dense<0.000000e+00> : vector<8x32xf32>
    %80 = tpu.matmul %79, %64, %cst_23 {dimension_numbers = #tpu.dot_dimension_numbers<[1], [0], [0], [1], [0, 0, 1, 1], [], []>} : vector<8x8xbf16>, vector<8x32xbf16>, vector<8x32xf32> -> vector<8x32xf32>
    %81 = vector.extract_strided_slice %33 {offsets = [0, 64], sizes = [8, 32], strides = [1, 1]} : vector<8x128xbf16> to vector<8x32xbf16>
    %82 = vector.extract_strided_slice %35 {offsets = [0, 64], sizes = [8, 32], strides = [1, 1]} : vector<8x128xbf16> to vector<8x32xbf16>
    %83 = vector.extract_strided_slice %37 {offsets = [0, 64], sizes = [8, 32], strides = [1, 1]} : vector<8x128xbf16> to vector<8x32xbf16>
    "tpu.trace_start"() <{level = 10 : i32, message = "qd,kd->qk"}> : () -> ()
    %cst_24 = arith.constant dense<0.000000e+00> : vector<8x8xf32>
    %84 = tpu.matmul %81, %82, %cst_24 {dimension_numbers = #tpu.dot_dimension_numbers<[1], [1], [0], [0], [0, 0, 1, 0], [], []>} : vector<8x32xbf16>, vector<8x32xbf16>, vector<8x8xf32> -> vector<8x8xf32>
    %cst_25 = arith.constant -1.000000e+09 : f32
    "tpu.trace_stop"() : () -> ()
    %85 = vector.broadcast %cst_25 : f32 to vector<8x8xf32>
    %86 = arith.select %42, %84, %85 : vector<8x8xi1>, vector<8x8xf32>
    %cst_26 = arith.constant dense<0xFF800000> : vector<8xf32>
    %87 = vector.multi_reduction <maximumf>, %86, %cst_26 [1] : vector<8x8xf32> to vector<8xf32>
    %88 = vector.shape_cast %87 : vector<8xf32> to vector<8x1xf32>
    %89 = vector.broadcast %88 : vector<8x1xf32> to vector<8x8xf32>
    %90 = arith.subf %86, %89 : vector<8x8xf32>
    %91 = math.exp %90 : vector<8x8xf32>
    %cst_27 = arith.constant dense<0.000000e+00> : vector<8xf32>
    %92 = vector.multi_reduction <add>, %91, %cst_27 [1] : vector<8x8xf32> to vector<8xf32>
    %93 = vector.shape_cast %92 : vector<8xf32> to vector<8x1xf32>
    %cst_28 = arith.constant 1.000000e+00 : f32
    %94 = vector.broadcast %cst_28 : f32 to vector<8x1xf32>
    %95 = arith.divf %94, %93 : vector<8x1xf32>
    %96 = vector.broadcast %95 : vector<8x1xf32> to vector<8x8xf32>
    %97 = arith.mulf %91, %96 : vector<8x8xf32>
    %98 = arith.truncf %97 : vector<8x8xf32> to vector<8x8xbf16>
    %cst_29 = arith.constant dense<0.000000e+00> : vector<8x32xf32>
    %99 = tpu.matmul %98, %83, %cst_29 {dimension_numbers = #tpu.dot_dimension_numbers<[1], [0], [0], [1], [0, 0, 1, 1], [], []>} : vector<8x8xbf16>, vector<8x32xbf16>, vector<8x32xf32> -> vector<8x32xf32>
    %100 = vector.extract_strided_slice %33 {offsets = [0, 96], sizes = [8, 32], strides = [1, 1]} : vector<8x128xbf16> to vector<8x32xbf16>
    %101 = vector.extract_strided_slice %35 {offsets = [0, 96], sizes = [8, 32], strides = [1, 1]} : vector<8x128xbf16> to vector<8x32xbf16>
    %102 = vector.extract_strided_slice %37 {offsets = [0, 96], sizes = [8, 32], strides = [1, 1]} : vector<8x128xbf16> to vector<8x32xbf16>
    "tpu.trace_start"() <{level = 10 : i32, message = "qd,kd->qk"}> : () -> ()
    %cst_30 = arith.constant dense<0.000000e+00> : vector<8x8xf32>
    %103 = tpu.matmul %100, %101, %cst_30 {dimension_numbers = #tpu.dot_dimension_numbers<[1], [1], [0], [0], [0, 0, 1, 0], [], []>} : vector<8x32xbf16>, vector<8x32xbf16>, vector<8x8xf32> -> vector<8x8xf32>
    %cst_31 = arith.constant -1.000000e+09 : f32
    "tpu.trace_stop"() : () -> ()
    %104 = vector.broadcast %cst_31 : f32 to vector<8x8xf32>
    %105 = arith.select %42, %103, %104 : vector<8x8xi1>, vector<8x8xf32>
    %cst_32 = arith.constant dense<0xFF800000> : vector<8xf32>
    %106 = vector.multi_reduction <maximumf>, %105, %cst_32 [1] : vector<8x8xf32> to vector<8xf32>
    %107 = vector.shape_cast %106 : vector<8xf32> to vector<8x1xf32>
    %108 = vector.broadcast %107 : vector<8x1xf32> to vector<8x8xf32>
    %109 = arith.subf %105, %108 : vector<8x8xf32>
    %110 = math.exp %109 : vector<8x8xf32>
    %cst_33 = arith.constant dense<0.000000e+00> : vector<8xf32>
    %111 = vector.multi_reduction <add>, %110, %cst_33 [1] : vector<8x8xf32> to vector<8xf32>
    %112 = vector.shape_cast %111 : vector<8xf32> to vector<8x1xf32>
    %cst_34 = arith.constant 1.000000e+00 : f32
    %113 = vector.broadcast %cst_34 : f32 to vector<8x1xf32>
    %114 = arith.divf %113, %112 : vector<8x1xf32>
    %115 = vector.broadcast %114 : vector<8x1xf32> to vector<8x8xf32>
    %116 = arith.mulf %110, %115 : vector<8x8xf32>
    %117 = arith.truncf %116 : vector<8x8xf32> to vector<8x8xbf16>
    %cst_35 = arith.constant dense<0.000000e+00> : vector<8x32xf32>
    %118 = tpu.matmul %117, %102, %cst_35 {dimension_numbers = #tpu.dot_dimension_numbers<[1], [0], [0], [1], [0, 0, 1, 1], [], []>} : vector<8x8xbf16>, vector<8x32xbf16>, vector<8x32xf32> -> vector<8x32xf32>
    %119 = tpu.concatenate %61, %80, %99, %118 in 1 : vector<8x32xf32>, vector<8x32xf32>, vector<8x32xf32>, vector<8x32xf32> -> vector<8x128xf32>
    %120 = arith.truncf %119 : vector<8x128xf32> to vector<8x128xbf16>
    %c0_36 = arith.constant 0 : index
    %c0_37 = arith.constant 0 : index
    %121 = vector.load %arg6[%c0_36, %c0_37] : memref<128x128xbf16, #tpu.memory_space<vmem>>, vector<128x128xbf16>
    %cst_38 = arith.constant dense<0.000000e+00> : vector<8x128xf32>
    %122 = tpu.matmul %120, %121, %cst_38 {dimension_numbers = #tpu.dot_dimension_numbers<[1], [0], [0], [1], [0, 0, 1, 1], [], []>} : vector<8x128xbf16>, vector<128x128xbf16>, vector<8x128xf32> -> vector<8x128xf32>
    %c0_39 = arith.constant 0 : index
    %c0_40 = arith.constant 0 : index
    %123 = vector.load %arg7[%c0_39, %c0_40] : memref<1x128xf32, #tpu.memory_space<vmem>>, vector<1x128xf32>
    %124 = vector.broadcast %123 : vector<1x128xf32> to vector<8x128xf32>
    %125 = arith.addf %122, %124 : vector<8x128xf32>
    %126 = arith.addf %1, %125 : vector<8x128xf32>
    %cst_41 = arith.constant dense<0.000000e+00> : vector<8xf32>
    %127 = vector.multi_reduction <add>, %126, %cst_41 [1] : vector<8x128xf32> to vector<8xf32>
    %128 = vector.shape_cast %127 : vector<8xf32> to vector<8x1xf32>
    %cst_42 = arith.constant 1.280000e+02 : f32
    %129 = vector.broadcast %cst_42 : f32 to vector<8x1xf32>
    %130 = arith.divf %128, %129 : vector<8x1xf32>
    %131 = vector.broadcast %130 : vector<8x1xf32> to vector<8x128xf32>
    %132 = arith.subf %126, %131 : vector<8x128xf32>
    %133 = arith.mulf %132, %132 : vector<8x128xf32>
    %cst_43 = arith.constant dense<0.000000e+00> : vector<8xf32>
    %134 = vector.multi_reduction <add>, %133, %cst_43 [1] : vector<8x128xf32> to vector<8xf32>
    %135 = vector.shape_cast %134 : vector<8xf32> to vector<8x1xf32>
    %cst_44 = arith.constant 0.00787401571 : f32
    %136 = vector.broadcast %cst_44 : f32 to vector<8x1xf32>
    %137 = arith.mulf %135, %136 : vector<8x1xf32>
    %138 = vector.broadcast %4 : f32 to vector<8x128xf32>
    %139 = arith.mulf %138, %132 : vector<8x128xf32>
    %140 = math.sqrt %137 : vector<8x1xf32>
    %cst_45 = arith.constant 9.99999997E-7 : f32
    %141 = vector.broadcast %cst_45 : f32 to vector<8x1xf32>
    %142 = arith.addf %140, %141 : vector<8x1xf32>
    %143 = vector.broadcast %142 : vector<8x1xf32> to vector<8x128xf32>
    %144 = arith.divf %139, %143 : vector<8x128xf32>
    %145 = vector.broadcast %5 : f32 to vector<8x128xf32>
    %146 = arith.addf %144, %145 : vector<8x128xf32>
    %147 = arith.truncf %146 : vector<8x128xf32> to vector<8x128xbf16>
    %c0_46 = arith.constant 0 : index
    %c0_47 = arith.constant 0 : index
    %148 = vector.load %arg8[%c0_46, %c0_47] : memref<128x256xbf16, #tpu.memory_space<vmem>>, vector<128x256xbf16>
    %cst_48 = arith.constant dense<0.000000e+00> : vector<8x256xf32>
    %149 = tpu.matmul %147, %148, %cst_48 {dimension_numbers = #tpu.dot_dimension_numbers<[1], [0], [0], [1], [0, 0, 1, 1], [], []>} : vector<8x128xbf16>, vector<128x256xbf16>, vector<8x256xf32> -> vector<8x256xf32>
    %c0_49 = arith.constant 0 : index
    %c0_50 = arith.constant 0 : index
    %150 = vector.load %arg9[%c0_49, %c0_50] : memref<1x256xf32, #tpu.memory_space<vmem>>, vector<1x256xf32>
    %151 = vector.broadcast %150 : vector<1x256xf32> to vector<8x256xf32>
    %152 = arith.addf %149, %151 : vector<8x256xf32>
    %cst_51 = arith.constant 0.000000e+00 : f32
    %153 = vector.broadcast %cst_51 : f32 to vector<8x256xf32>
    %154 = arith.maximumf %152, %153 : vector<8x256xf32>
    %155 = arith.truncf %154 : vector<8x256xf32> to vector<8x256xbf16>
    %c0_52 = arith.constant 0 : index
    %c0_53 = arith.constant 0 : index
    %156 = vector.load %arg10[%c0_52, %c0_53] : memref<256x128xbf16, #tpu.memory_space<vmem>>, vector<256x128xbf16>
    %cst_54 = arith.constant dense<0.000000e+00> : vector<8x128xf32>
    %157 = tpu.matmul %155, %156, %cst_54 {dimension_numbers = #tpu.dot_dimension_numbers<[1], [0], [0], [1], [0, 0, 1, 1], [], []>} : vector<8x256xbf16>, vector<256x128xbf16>, vector<8x128xf32> -> vector<8x128xf32>
    %c0_55 = arith.constant 0 : index
    %c0_56 = arith.constant 0 : index
    %158 = vector.load %arg11[%c0_55, %c0_56] : memref<1x128xf32, #tpu.memory_space<vmem>>, vector<1x128xf32>
    %159 = vector.broadcast %158 : vector<1x128xf32> to vector<8x128xf32>
    %160 = arith.addf %157, %159 : vector<8x128xf32>
    %161 = arith.addf %126, %160 : vector<8x128xf32>
    %c0_57 = arith.constant 0 : index
    %c0_58 = arith.constant 0 : index
    %c0_59 = arith.constant 0 : index
    %162 = vector.load %arg12[%c0_57, %c0_58, %c0_59] : memref<1x8x128xf32, #tpu.memory_space<vmem>>, vector<1x8x128xf32>
    %163 = vector.shape_cast %162 : vector<1x8x128xf32> to vector<8x128xf32>
    %164 = vector.shape_cast %161 : vector<8x128xf32> to vector<1x8x128xf32>
    tpu.vector_store %arg12[%c0_57, %c0_58, %c0_59], %164 {strides = array<i32>} : memref<1x8x128xf32, #tpu.memory_space<vmem>>, vector<1x8x128xf32>,
    return
  }
  func.func @transform_0(%arg0: i32, %arg1: memref<2xi32, #tpu.memory_space<smem>>) -> i32 {
    %c0_i32 = arith.constant 0 : i32
    %c0_i32_0 = arith.constant 0 : i32
    return %c0_i32 : i32
  }
  func.func @transform_1(%arg0: i32, %arg1: memref<2xi32, #tpu.memory_space<smem>>) -> (i32, i32, i32) {
    %c0_i32 = arith.constant 0 : i32
    %c0_i32_0 = arith.constant 0 : i32
    %c0_i32_1 = arith.constant 0 : i32
    return %arg0, %c0_i32, %c0_i32_0 : i32, i32, i32
  }
  func.func @transform_2(%arg0: i32, %arg1: memref<2xi32, #tpu.memory_space<smem>>) -> (i32, i32) {
    %c0_i32 = arith.constant 0 : i32
    %c0_i32_0 = arith.constant 0 : i32
    %c0_i32_1 = arith.constant 0 : i32
    return %c0_i32, %c0_i32_0 : i32, i32
  }
  func.func @transform_3(%arg0: i32, %arg1: memref<2xi32, #tpu.memory_space<smem>>) -> (i32, i32) {
    %c0_i32 = arith.constant 0 : i32
    %c0_i32_0 = arith.constant 0 : i32
    %c0_i32_1 = arith.constant 0 : i32
    return %c0_i32, %c0_i32_0 : i32, i32
  }
  func.func @transform_4(%arg0: i32, %arg1: memref<2xi32, #tpu.memory_space<smem>>) -> (i32, i32) {
    %c0_i32 = arith.constant 0 : i32
    %c0_i32_0 = arith.constant 0 : i32
    %c0_i32_1 = arith.constant 0 : i32
    return %c0_i32, %c0_i32_0 : i32, i32
  }
  func.func @transform_5(%arg0: i32, %arg1: memref<2xi32, #tpu.memory_space<smem>>) -> (i32, i32) {
    %c0_i32 = arith.constant 0 : i32
    %c0_i32_0 = arith.constant 0 : i32
    %c0_i32_1 = arith.constant 0 : i32
    return %c0_i32, %c0_i32_0 : i32, i32
  }
  func.func @transform_6(%arg0: i32, %arg1: memref<2xi32, #tpu.memory_space<smem>>) -> (i32, i32) {
    %c0_i32 = arith.constant 0 : i32
    %c0_i32_0 = arith.constant 0 : i32
    %c0_i32_1 = arith.constant 0 : i32
    return %c0_i32, %c0_i32_0 : i32, i32
  }
  func.func @transform_7(%arg0: i32, %arg1: memref<2xi32, #tpu.memory_space<smem>>) -> (i32, i32) {
    %c0_i32 = arith.constant 0 : i32
    %c0_i32_0 = arith.constant 0 : i32
    %c0_i32_1 = arith.constant 0 : i32
    return %c0_i32, %c0_i32_0 : i32, i32
  }
  func.func @transform_8(%arg0: i32, %arg1: memref<2xi32, #tpu.memory_space<smem>>) -> (i32, i32) {
    %c0_i32 = arith.constant 0 : i32
    %c0_i32_0 = arith.constant 0 : i32
    %c0_i32_1 = arith.constant 0 : i32
    return %c0_i32, %c0_i32_0 : i32, i32
  }
  func.func @transform_9(%arg0: i32, %arg1: memref<2xi32, #tpu.memory_space<smem>>) -> (i32, i32) {
    %c0_i32 = arith.constant 0 : i32
    %c0_i32_0 = arith.constant 0 : i32
    %c0_i32_1 = arith.constant 0 : i32
    return %c0_i32, %c0_i32_0 : i32, i32
  }
  func.func @transform_10(%arg0: i32, %arg1: memref<2xi32, #tpu.memory_space<smem>>) -> (i32, i32, i32) {
    %c0_i32 = arith.constant 0 : i32
    %c0_i32_0 = arith.constant 0 : i32
    %c0_i32_1 = arith.constant 0 : i32
    return %arg0, %c0_i32, %c0_i32_0 : i32, i32, i32
  }
}

</mosaic_0001>

<llo_original>
// kernel: tpu_custom_call.1
$region0: #{tpu_custom_call.1}
  #allocation0 [shape = 'u32[]', space=smem, size = 0x4, offset = 0x4, fixed_abs, tag = 'smem constant byte address 0x4 - core index']
  #allocation1 [shape = 'u32[72,128]{1,0:T(1,128)}', space=vmem, size = 0x9000, scoped, tag = 'internal scratch']
  #allocation2 [shape = 's32[1]{0}', space=sflag, size = 0x4, scoped, tag = 'scoped memory for tpu_custom_call.1']
  #allocation3 [shape = 'u8[512]{0}', space=smem, size = 0x200, scoped, tag = 'prefetched SMEM operand 0']
  %s0 = inlined_call_operand.hbm [shape: s32[2], index: 0, kind: input, shape index: {}]
  %s1 = inlined_call_operand.hbm [shape: f32[4], index: 1, kind: input, shape index: {}]
  %s2 = inlined_call_operand.hbm [shape: f32[2,8,128], index: 2, kind: input, shape index: {}]
  %s3 = inlined_call_operand.hbm [shape: bf16[128,384], index: 3, kind: input, shape index: {}]
  %s4 = inlined_call_operand.vmem [shape: f32[1,384], index: 4, kind: input, shape index: {}]
  %s5 = inlined_call_operand.hbm [shape: bf16[128,128], index: 5, kind: input, shape index: {}]
  %s6 = inlined_call_operand.hbm [shape: f32[1,128], index: 6, kind: input, shape index: {}]
  %s7 = inlined_call_operand.hbm [shape: bf16[128,256], index: 7, kind: input, shape index: {}]
  %s8 = inlined_call_operand.vmem [shape: f32[1,256], index: 8, kind: input, shape index: {}]
  %s9 = inlined_call_operand.hbm [shape: bf16[256,128], index: 9, kind: input, shape index: {}]
  %s10 = inlined_call_operand.vmem [shape: f32[1,128], index: 10, kind: input, shape index: {}]
  %s11 = inlined_call_operand.hbm [shape: f32[2,8,128], index: 11, kind: output, shape index: {}]
  %s12 = sld [smem:[#allocation0]]
  $region101: #{tpu_custom_call.1} parent=0
    _
  %s14 = ssub.s32 1, %s12
  %s15 = scalar_select 0, %s14, %s12
  %s17 = sshll.u32 %s0, 4
  %s18 = int_to_ptr.hbm [resolvable:$true] %s17
  %20 = dma.hbm_to_smem %s18, 16, [#allocation3], [#allocation2]
  %22 = dma.done [#allocation2], 16
  %23 = sfence
  $region1: #{tpu_custom_call.1} parent=0
    #allocation4 [shape = 'u8[512]{0}', space=smem, size = 0x200, scoped, tag = 'input window, operand 1, single buffered']
    #allocation5 [shape = 's32[2]{0}', space=sflag, size = 0x8, scoped, tag = 'scoped memory for tpu_custom_call.1']
    #allocation6 [shape = 's32[2]{0}', space=sflag, size = 0x8, scoped, tag = 'scoped memory for tpu_custom_call.1']
    #allocation7 [shape = 's32[2]{0}', space=sflag, size = 0x8, scoped, tag = 'scoped memory for tpu_custom_call.1']
    #allocation8 [shape = 'u8[8192]{0}', space=vmem, size = 0x2000, scoped, tag = 'input window, operand 2']
    #allocation9 [shape = 'u8[98304]{0}', space=vmem, size = 0x18000, scoped, tag = 'input window, operand 3, single buffered']
    #allocation10 [shape = 's32[1]{0}', space=sflag, size = 0x4, scoped, tag = 'scoped memory for tpu_custom_call.1']
    #allocation11 [shape = 'u8[32768]{0}', space=vmem, size = 0x8000, scoped, tag = 'input window, operand 5, single buffered']
    #allocation12 [shape = 'u8[512]{0}', space=vmem, size = 0x400, scoped, tag = 'input window, operand 6, single buffered']
    #allocation13 [shape = 's32[1]{0}', space=sflag, size = 0x4, scoped, tag = 'scoped memory for tpu_custom_call.1']
    #allocation14 [shape = 'u8[65536]{0}', space=vmem, size = 0x10000, scoped, tag = 'input window, operand 7, single buffered']
    #allocation15 [shape = 'u8[65536]{0}', space=vmem, size = 0x10000, scoped, tag = 'input window, operand 9, single buffered']
    #allocation16 [shape = 's32[1]{0}', space=sflag, size = 0x4, scoped, tag = 'scoped memory for tpu_custom_call.1']
    #allocation17 [shape = 'u8[8192]{0}', space=vmem, size = 0x2000, scoped, tag = 'output window, operand 0']
    %24 = vsyncpa [#allocation7], 0
    %25 = vsyncpa [#allocation5], 0
    %s26 = scalar_lea.sflag [#allocation5], 1
    %27 = vsyncpa %s26, 0
    %28 = vsyncpa [#allocation10], 0
    %29 = vsyncpa [#allocation13], 0
    %30 = vsyncpa [#allocation16], 0
    %31 = vsyncpa [#allocation6], 0
    %s32 = scalar_lea.sflag [#allocation6], 1
    %33 = vsyncpa %s32, 0
    loop: start=0, step=1, limit=4
    $region2: #{tpu_custom_call.1} parent=1 // loop_pre_header
      _
    $region3: #{tpu_custom_call.1} parent=1 // loop_header
      %s35 = sphi 0, %s39
      %p36 = scmp.ge.s32.totalorder %s35, 4
      %s43 = sphi 0, %s43
      %s45 = sphi 0, %s43
      %s46 = sphi 0, %s45
      %s60 = sphi 0, %s46
      %s66 = sphi 0, %s68
      %s69 = sphi 0, %s66
      %s70 = sphi 0, %s69
      %s86 = sphi 0, %s70
      %s90 = sphi 0, %s90
      %s92 = sphi 0, %s90
      %s93 = sphi 0, %s92
      %s107 = sphi 0, %s93
      %s111 = sphi 0, %s111
      %s113 = sphi 0, %s111
      %s114 = sphi 0, %s113
      %s128 = sphi 0, %s114
      %s132 = sphi 0, %s132
      %s134 = sphi 0, %s132
      %s135 = sphi 0, %s134
      %s149 = sphi 0, %s135
      %s153 = sphi 0, %s153
      %s155 = sphi 0, %s153
      %s156 = sphi 0, %s155
      %s170 = sphi 0, %s156
      %s174 = sphi 0, %s174
      %s176 = sphi 0, %s174
      %s177 = sphi 0, %s176
      %s191 = sphi 0, %s177
      %s195 = sphi 0, %s195
      %s197 = sphi 0, %s195
      %s198 = sphi 0, %s197
      %s212 = sphi 0, %s198
      %s216 = sphi 0, %s216
      %s218 = sphi 0, %s216
      %s219 = sphi 0, %s218
      %s233 = sphi 0, %s219
      %s237 = sphi 0, %s237
      %s239 = sphi 0, %s237
      %s240 = sphi 0, %s239
      %s254 = sphi 0, %s240
      %s260 = sphi 0, %s262
      %s263 = sphi 0, %s260
      %s264 = sphi 0, %s263
      %s280 = sphi 0, %s264
    $region4: #{tpu_custom_call.1} parent=1 // loop_header_branch
      %38 = sbr.rel (%p36) target = $region8
    $region5: #{tpu_custom_call.1} parent=1 // loop_body
      %s40 = ssub.s32 %s35, 1
      %s41 = ssub.s32 %s35, 2
      %s42 = sadd.s32 %s35, 1
      %s44 = sadd.s32 %s43, 1
      %p47 = scmp.eq.s32.totalorder %s35, 1
      %p48 = scmp.ne.s32.totalorder %s43, %s45
      %p49 = scmp.eq.s32.totalorder %s35, 0
      %p50 = por %p48, %p49
      %p51 = scmp.ne.s32.totalorder %s43, %s45
      %p52 = scmp.eq.s32.totalorder %s40, 1
      %p53 = por %p51, %p52
      %p54 = scmp.ne.s32.totalorder %s45, %s46
      %p55 = scmp.eq.s32.totalorder %s40, 0
      %p56 = por %p54, %p55
      %p57 = scmp.ne.s32.totalorder %s45, %s46
      %p58 = scmp.eq.s32.totalorder %s41, 1
      %p59 = por %p57, %p58
      %p61 = scmp.ne.s32.totalorder %s46, %s60
      %p62 = scmp.eq.s32.totalorder %s41, 0
      %p63 = por %p61, %p62
      %s64 = ssub.s32 %s35, %s42
      %p65 = scmp.eq.s32.totalorder %s64, 0
      %s67 = sadd.s32 %s66, 1
      %s68 = scalar_select %p65, %s66, %s67
      %p71 = pneg %p65
      %p72 = scmp.eq.s32.totalorder %s35, 1
      %p73 = por %p71, %p72
      %p74 = scmp.ne.s32.totalorder %s66, %s69
      %p75 = scmp.eq.s32.totalorder %s35, 0
      %p76 = por %p74, %p75
      %p77 = scmp.ne.s32.totalorder %s66, %s69
      %p78 = scmp.eq.s32.totalorder %s40, 1
      %p79 = por %p77, %p78
      %p80 = scmp.ne.s32.totalorder %s69, %s70
      %p81 = scmp.eq.s32.totalorder %s40, 0
      %p82 = por %p80, %p81
      %p83 = scmp.ne.s32.totalorder %s69, %s70
      %p84 = scmp.eq.s32.totalorder %s41, 1
      %p85 = por %p83, %p84
      %p87 = scmp.ne.s32.totalorder %s70, %s86
      %p88 = scmp.eq.s32.totalorder %s41, 0
      %p89 = por %p87, %p88
      %s91 = sadd.s32 %s90, 1
      %p94 = scmp.eq.s32.totalorder %s35, 1
      %p95 = scmp.ne.s32.totalorder %s90, %s92
      %p96 = scmp.eq.s32.totalorder %s35, 0
      %p97 = por %p95, %p96
      %p98 = scmp.ne.s32.totalorder %s90, %s92
      %p99 = scmp.eq.s32.totalorder %s40, 1
      %p100 = por %p98, %p99
      %p101 = scmp.ne.s32.totalorder %s92, %s93
      %p102 = scmp.eq.s32.totalorder %s40, 0
      %p103 = por %p101, %p102
      %p104 = scmp.ne.s32.totalorder %s92, %s93
      %p105 = scmp.eq.s32.totalorder %s41, 1
      %p106 = por %p104, %p105
      %p108 = scmp.ne.s32.totalorder %s93, %s107
      %p109 = scmp.eq.s32.totalorder %s41, 0
      %p110 = por %p108, %p109
      %s112 = sadd.s32 %s111, 1
      %p115 = scmp.eq.s32.totalorder %s35, 1
      %p116 = scmp.ne.s32.totalorder %s111, %s113
      %p117 = scmp.eq.s32.totalorder %s35, 0
      %p118 = por %p116, %p117
      %p119 = scmp.ne.s32.totalorder %s111, %s113
      %p120 = scmp.eq.s32.totalorder %s40, 1
      %p121 = por %p119, %p120
      %p122 = scmp.ne.s32.totalorder %s113, %s114
      %p123 = scmp.eq.s32.totalorder %s40, 0
      %p124 = por %p122, %p123
      %p125 = scmp.ne.s32.totalorder %s113, %s114
      %p126 = scmp.eq.s32.totalorder %s41, 1
      %p127 = por %p125, %p126
      %p129 = scmp.ne.s32.totalorder %s114, %s128
      %p130 = scmp.eq.s32.totalorder %s41, 0
      %p131 = por %p129, %p130
      %s133 = sadd.s32 %s132, 1
      %p136 = scmp.eq.s32.totalorder %s35, 1
      %p137 = scmp.ne.s32.totalorder %s132, %s134
      %p138 = scmp.eq.s32.totalorder %s35, 0
      %p139 = por %p137, %p138
      %p140 = scmp.ne.s32.totalorder %s132, %s134
      %p141 = scmp.eq.s32.totalorder %s40, 1
      %p142 = por %p140, %p141
      %p143 = scmp.ne.s32.totalorder %s134, %s135
      %p144 = scmp.eq.s32.totalorder %s40, 0
      %p145 = por %p143, %p144
      %p146 = scmp.ne.s32.totalorder %s134, %s135
      %p147 = scmp.eq.s32.totalorder %s41, 1
      %p148 = por %p146, %p147
      %p150 = scmp.ne.s32.totalorder %s135, %s149
      %p151 = scmp.eq.s32.totalorder %s41, 0
      %p152 = por %p150, %p151
      %s154 = sadd.s32 %s153, 1
      %p157 = scmp.eq.s32.totalorder %s35, 1
      %p158 = scmp.ne.s32.totalorder %s153, %s155
      %p159 = scmp.eq.s32.totalorder %s35, 0
      %p160 = por %p158, %p159
      %p161 = scmp.ne.s32.totalorder %s153, %s155
      %p162 = scmp.eq.s32.totalorder %s40, 1
      %p163 = por %p161, %p162
      %p164 = scmp.ne.s32.totalorder %s155, %s156
      %p165 = scmp.eq.s32.totalorder %s40, 0
      %p166 = por %p164, %p165
      %p167 = scmp.ne.s32.totalorder %s155, %s156
      %p168 = scmp.eq.s32.totalorder %s41, 1
      %p169 = por %p167, %p168
      %p171 = scmp.ne.s32.totalorder %s156, %s170
      %p172 = scmp.eq.s32.totalorder %s41, 0
      %p173 = por %p171, %p172
      %s175 = sadd.s32 %s174, 1
      %p178 = scmp.eq.s32.totalorder %s35, 1
      %p179 = scmp.ne.s32.totalorder %s174, %s176
      %p180 = scmp.eq.s32.totalorder %s35, 0
      %p181 = por %p179, %p180
      %p182 = scmp.ne.s32.totalorder %s174, %s176
      %p183 = scmp.eq.s32.totalorder %s40, 1
      %p184 = por %p182, %p183
      %p185 = scmp.ne.s32.totalorder %s176, %s177
      %p186 = scmp.eq.s32.totalorder %s40, 0
      %p187 = por %p185, %p186
      %p188 = scmp.ne.s32.totalorder %s176, %s177
      %p189 = scmp.eq.s32.totalorder %s41, 1
      %p190 = por %p188, %p189
      %p192 = scmp.ne.s32.totalorder %s177, %s191
      %p193 = scmp.eq.s32.totalorder %s41, 0
      %p194 = por %p192, %p193
      %s196 = sadd.s32 %s195, 1
      %p199 = scmp.eq.s32.totalorder %s35, 1
      %p200 = scmp.ne.s32.totalorder %s195, %s197
      %p201 = scmp.eq.s32.totalorder %s35, 0
      %p202 = por %p200, %p201
      %p203 = scmp.ne.s32.totalorder %s195, %s197
      %p204 = scmp.eq.s32.totalorder %s40, 1
      %p205 = por %p203, %p204
      %p206 = scmp.ne.s32.totalorder %s197, %s198
      %p207 = scmp.eq.s32.totalorder %s40, 0
      %p208 = por %p206, %p207
      %p209 = scmp.ne.s32.totalorder %s197, %s198
      %p210 = scmp.eq.s32.totalorder %s41, 1
      %p211 = por %p209, %p210
      %p213 = scmp.ne.s32.totalorder %s198, %s212
      %p214 = scmp.eq.s32.totalorder %s41, 0
      %p215 = por %p213, %p214
      %s217 = sadd.s32 %s216, 1
      %p220 = scmp.eq.s32.totalorder %s35, 1
      %p221 = scmp.ne.s32.totalorder %s216, %s218
      %p222 = scmp.eq.s32.totalorder %s35, 0
      %p223 = por %p221, %p222
      %p224 = scmp.ne.s32.totalorder %s216, %s218
      %p225 = scmp.eq.s32.totalorder %s40, 1
      %p226 = por %p224, %p225
      %p227 = scmp.ne.s32.totalorder %s218, %s219
      %p228 = scmp.eq.s32.totalorder %s40, 0
      %p229 = por %p227, %p228
      %p230 = scmp.ne.s32.totalorder %s218, %s219
      %p231 = scmp.eq.s32.totalorder %s41, 1
      %p232 = por %p230, %p231
      %p234 = scmp.ne.s32.totalorder %s219, %s233
      %p235 = scmp.eq.s32.totalorder %s41, 0
      %p236 = por %p234, %p235
      %s238 = sadd.s32 %s237, 1
      %p241 = scmp.eq.s32.totalorder %s35, 1
      %p242 = scmp.ne.s32.totalorder %s237, %s239
      %p243 = scmp.eq.s32.totalorder %s35, 0
      %p244 = por %p242, %p243
      %p245 = scmp.ne.s32.totalorder %s237, %s239
      %p246 = scmp.eq.s32.totalorder %s40, 1
      %p247 = por %p245, %p246
      %p248 = scmp.ne.s32.totalorder %s239, %s240
      %p249 = scmp.eq.s32.totalorder %s40, 0
      %p250 = por %p248, %p249
      %p251 = scmp.ne.s32.totalorder %s239, %s240
      %p252 = scmp.eq.s32.totalorder %s41, 1
      %p253 = por %p251, %p252
      %p255 = scmp.ne.s32.totalorder %s240, %s254
      %p256 = scmp.eq.s32.totalorder %s41, 0
      %p257 = por %p255, %p256
      %s258 = ssub.s32 %s35, %s42
      %p259 = scmp.eq.s32.totalorder %s258, 0
      %s261 = sadd.s32 %s260, 1
      %s262 = scalar_select %p259, %s260, %s261
      %p265 = pneg %p259
      %p266 = scmp.eq.s32.totalorder %s35, 1
      %p267 = por %p265, %p266
      %p268 = scmp.ne.s32.totalorder %s260, %s263
      %p269 = scmp.eq.s32.totalorder %s35, 0
      %p270 = por %p268, %p269
      %p271 = scmp.ne.s32.totalorder %s260, %s263
      %p272 = scmp.eq.s32.totalorder %s40, 1
      %p273 = por %p271, %p272
      %p274 = scmp.ne.s32.totalorder %s263, %s264
      %p275 = scmp.eq.s32.totalorder %s40, 0
      %p276 = por %p274, %p275
      %p277 = scmp.ne.s32.totalorder %s263, %s264
      %p278 = scmp.eq.s32.totalorder %s41, 1
      %p279 = por %p277, %p278
      %p281 = scmp.ne.s32.totalorder %s264, %s280
      %p282 = scmp.eq.s32.totalorder %s41, 0
      %p283 = por %p281, %p282
      %p284 = scmp.le.s32.totalorder 1, %s35
      %p285 = scmp.lt.s32.totalorder %s35, 3
      %p286 = pnand %p284, %p285
      %p287 = pneg %p286
      // Predicated region
      $region9: #{tpu_custom_call.1} parent=5 // pred_check
        _
      $region10: #{tpu_custom_call.1} parent=5 // pred_check_branch
        %289 = sbr.rel (%p286) target = $region12
      $region11: #{tpu_custom_call.1} parent=5 // pred_region
        %s290 = ssub.s32 %s35, 1
        // Predicated region
        $region13: #{tpu_custom_call.1} parent=11 // pred_check
          %p291 = pneg %p56
        $region14: #{tpu_custom_call.1} parent=11 // pred_check_branch
          %293 = sbr.rel (%p291) target = $region16
        $region15: #{tpu_custom_call.1} parent=11 // pred_region
          %295 = vsyncadd [#allocation7], 0
          %s297 = sshll.u32 %s1, 4
          %s298 = int_to_ptr.hbm [resolvable:$true] %s297
          %300 = dma.hbm_to_smem %s298, 16, [#allocation4], [#allocation7]
        $region16: #{tpu_custom_call.1} parent=11 // pred_fallthru
          _
        // Predicated region
        $region17: #{tpu_custom_call.1} parent=11 // pred_check
          %p301 = pneg %p103
        $region18: #{tpu_custom_call.1} parent=11 // pred_check_branch
          %303 = sbr.rel (%p301) target = $region20
        $region19: #{tpu_custom_call.1} parent=11 // pred_region
          %305 = vsyncadd [#allocation10], 0
          %s306 = sshll.u32 %s3, 4
          %s307 = int_to_ptr.hbm [resolvable:$true] %s306
          %s308 = sshll.u32 [#allocation9], 4
          %s309 = int_to_ptr.vmem [resolvable:$true] %s308
          %314 = dma.hbm_to_vmem [thread:$0]  %s307, 3072, %s309, [#allocation10], 192, 192, 12
        $region20: #{tpu_custom_call.1} parent=11 // pred_fallthru
          _
        // Predicated region
        $region21: #{tpu_custom_call.1} parent=11 // pred_check
          %p315 = pneg %p124
        $region22: #{tpu_custom_call.1} parent=11 // pred_check_branch
          %317 = sbr.rel (%p315) target = $region24
        $region23: #{tpu_custom_call.1} parent=11 // pred_region
          _
        $region24: #{tpu_custom_call.1} parent=11 // pred_fallthru
          _
        // Predicated region
        $region25: #{tpu_custom_call.1} parent=11 // pred_check
          %p318 = pneg %p145
        $region26: #{tpu_custom_call.1} parent=11 // pred_check_branch
          %320 = sbr.rel (%p318) target = $region28
        $region27: #{tpu_custom_call.1} parent=11 // pred_region
          %322 = vsyncadd [#allocation10], 0
          %s323 = sshll.u32 %s5, 4
          %s324 = int_to_ptr.hbm [resolvable:$true] %s323
          %s325 = sshll.u32 [#allocation11], 4
          %s326 = int_to_ptr.vmem [resolvable:$true] %s325
          %331 = dma.hbm_to_vmem [thread:$0]  %s324, 1024, %s326, [#allocation10], 64, 64, 4
        $region28: #{tpu_custom_call.1} parent=11 // pred_fallthru
          _
        // Predicated region
        $region29: #{tpu_custom_call.1} parent=11 // pred_check
          %p332 = pneg %p166
        $region30: #{tpu_custom_call.1} parent=11 // pred_check_branch
          %334 = sbr.rel (%p332) target = $region32
        $region31: #{tpu_custom_call.1} parent=11 // pred_region
          %336 = vsyncadd [#allocation13], 0
          %s338 = sshll.u32 %s6, 4
          %s339 = int_to_ptr.hbm [resolvable:$true] %s338
          %s340 = sshll.u32 [#allocation12], 4
          %s341 = int_to_ptr.vmem [resolvable:$true] %s340
          %343 = dma.hbm_to_vmem [thread:$0]  %s339, 16, %s341, [#allocation13]
        $region32: #{tpu_custom_call.1} parent=11 // pred_fallthru
          _
        // Predicated region
        $region33: #{tpu_custom_call.1} parent=11 // pred_check
          %p344 = pneg %p187
        $region34: #{tpu_custom_call.1} parent=11 // pred_check_branch
          %346 = sbr.rel (%p344) target = $region36
        $region35: #{tpu_custom_call.1} parent=11 // pred_region
          %348 = vsyncadd [#allocation13], 0
          %s349 = sshll.u32 %s7, 4
          %s350 = int_to_ptr.hbm [resolvable:$true] %s349
          %s351 = sshll.u32 [#allocation14], 4
          %s352 = int_to_ptr.vmem [resolvable:$true] %s351
          %357 = dma.hbm_to_vmem [thread:$0]  %s350, 2048, %s352, [#allocation13], 128, 128, 8
        $region36: #{tpu_custom_call.1} parent=11 // pred_fallthru
          _
        // Predicated region
        $region37: #{tpu_custom_call.1} parent=11 // pred_check
          %p358 = pneg %p208
        $region38: #{tpu_custom_call.1} parent=11 // pred_check_branch
          %360 = sbr.rel (%p358) target = $region40
        $region39: #{tpu_custom_call.1} parent=11 // pred_region
          _
        $region40: #{tpu_custom_call.1} parent=11 // pred_fallthru
          _
        // Predicated region
        $region41: #{tpu_custom_call.1} parent=11 // pred_check
          %p361 = pneg %p229
        $region42: #{tpu_custom_call.1} parent=11 // pred_check_branch
          %363 = sbr.rel (%p361) target = $region44
        $region43: #{tpu_custom_call.1} parent=11 // pred_region
          %365 = vsyncadd [#allocation16], 0
          %s366 = sshll.u32 %s9, 4
          %s367 = int_to_ptr.hbm [resolvable:$true] %s366
          %s368 = sshll.u32 [#allocation15], 4
          %s369 = int_to_ptr.vmem [resolvable:$true] %s368
          %374 = dma.hbm_to_vmem [thread:$0]  %s367, 2048, %s369, [#allocation16], 64, 64, 4
        $region44: #{tpu_custom_call.1} parent=11 // pred_fallthru
          _
        // Predicated region
        $region45: #{tpu_custom_call.1} parent=11 // pred_check
          %p375 = pneg %p250
        $region46: #{tpu_custom_call.1} parent=11 // pred_check_branch
          %377 = sbr.rel (%p375) target = $region48
        $region47: #{tpu_custom_call.1} parent=11 // pred_region
          _
        $region48: #{tpu_custom_call.1} parent=11 // pred_fallthru
          _
      $region12: #{tpu_custom_call.1} parent=5 // pred_fallthru
        _
      %p378 = scmp.lt.s32.totalorder %s35, 2
      // Predicated region
      $region49: #{tpu_custom_call.1} parent=5 // pred_check
        %p379 = pneg %p378
      $region50: #{tpu_custom_call.1} parent=5 // pred_check_branch
        %381 = sbr.rel (%p379) target = $region52
      $region51: #{tpu_custom_call.1} parent=5 // pred_region
        // Predicated region
        $region53: #{tpu_custom_call.1} parent=51 // pred_check
          %p382 = pneg %p76
        $region54: #{tpu_custom_call.1} parent=51 // pred_check_branch
          %384 = sbr.rel (%p382) target = $region56
        $region55: #{tpu_custom_call.1} parent=51 // pred_region
          %s385 = sand.u32 %s66, 1
          %s386 = scalar_lea.sflag [#allocation5], %s385
          %s387 = sand.u32 %s66, 1
          %s388 = smul.addr %s387, 8
          %s389 = scalar_lea.vmem [#allocation8], %s388
          %391 = vsyncadd %s386, 0
          %s392 = smul.addr %s35, 8
          %s393 = scalar_lea.hbm %s2, %s392
          %s395 = sshll.u32 %s393, 4
          %s396 = int_to_ptr.hbm [resolvable:$true] %s395
          %s397 = sshll.u32 %s389, 4
          %s398 = int_to_ptr.vmem [resolvable:$true] %s397
          %400 = dma.hbm_to_vmem [thread:$0]  %s396, 128, %s398, %s386
        $region56: #{tpu_custom_call.1} parent=51 // pred_fallthru
          _
      $region52: #{tpu_custom_call.1} parent=5 // pred_fallthru
        _
      %p401 = scmp.le.s32.totalorder 1, %s35
      %p402 = scmp.lt.s32.totalorder %s35, 3
      %p403 = pnand %p401, %p402
      %p404 = pneg %p403
      // Predicated region
      $region57: #{tpu_custom_call.1} parent=5 // pred_check
        _
      $region58: #{tpu_custom_call.1} parent=5 // pred_check_branch
        %406 = sbr.rel (%p403) target = $region60
      $region59: #{tpu_custom_call.1} parent=5 // pred_region
        %s407 = ssub.s32 %s35, 1
        // Predicated region
        $region61: #{tpu_custom_call.1} parent=59 // pred_check
          %p408 = pneg %p56
        $region62: #{tpu_custom_call.1} parent=59 // pred_check_branch
          %410 = sbr.rel (%p408) target = $region64
        $region63: #{tpu_custom_call.1} parent=59 // pred_region
          %412 = dma.done [#allocation7], 16
        $region64: #{tpu_custom_call.1} parent=59 // pred_fallthru
          _
        %s413 = sand.u32 %s69, 1
        %s414 = scalar_lea.sflag [#allocation5], %s413
        %s415 = sand.u32 %s69, 1
        %s416 = smul.addr %s415, 8
        %s417 = scalar_lea.vmem [#allocation8], %s416
        // Predicated region
        $region65: #{tpu_custom_call.1} parent=59 // pred_check
          %p418 = pneg %p82
        $region66: #{tpu_custom_call.1} parent=59 // pred_check_branch
          %420 = sbr.rel (%p418) target = $region68
        $region67: #{tpu_custom_call.1} parent=59 // pred_region
          %422 = dma.done %s414, 128
        $region68: #{tpu_custom_call.1} parent=59 // pred_fallthru
          _
        // Predicated region
        $region69: #{tpu_custom_call.1} parent=59 // pred_check
          %p423 = pneg %p103
        $region70: #{tpu_custom_call.1} parent=59 // pred_check_branch
          %425 = sbr.rel (%p423) target = $region72
        $region71: #{tpu_custom_call.1} parent=59 // pred_region
          %427 = dma.done [#allocation10], 3072
        $region72: #{tpu_custom_call.1} parent=59 // pred_fallthru
          _
        // Predicated region
        $region73: #{tpu_custom_call.1} parent=59 // pred_check
          %p428 = pneg %p145
        $region74: #{tpu_custom_call.1} parent=59 // pred_check_branch
          %430 = sbr.rel (%p428) target = $region76
        $region75: #{tpu_custom_call.1} parent=59 // pred_region
          %432 = dma.done [#allocation10], 1024
        $region76: #{tpu_custom_call.1} parent=59 // pred_fallthru
          _
        // Predicated region
        $region77: #{tpu_custom_call.1} parent=59 // pred_check
          %p433 = pneg %p166
        $region78: #{tpu_custom_call.1} parent=59 // pred_check_branch
          %435 = sbr.rel (%p433) target = $region80
        $region79: #{tpu_custom_call.1} parent=59 // pred_region
          %437 = dma.done [#allocation13], 16
        $region80: #{tpu_custom_call.1} parent=59 // pred_fallthru
          _
        // Predicated region
        $region81: #{tpu_custom_call.1} parent=59 // pred_check
          %p438 = pneg %p187
        $region82: #{tpu_custom_call.1} parent=59 // pred_check_branch
          %440 = sbr.rel (%p438) target = $region84
        $region83: #{tpu_custom_call.1} parent=59 // pred_region
          %442 = dma.done [#allocation13], 2048
        $region84: #{tpu_custom_call.1} parent=59 // pred_fallthru
          _
        // Predicated region
        $region85: #{tpu_custom_call.1} parent=59 // pred_check
          %p443 = pneg %p229
        $region86: #{tpu_custom_call.1} parent=59 // pred_check_branch
          %445 = sbr.rel (%p443) target = $region88
        $region87: #{tpu_custom_call.1} parent=59 // pred_region
          %447 = dma.done [#allocation16], 2048
        $region88: #{tpu_custom_call.1} parent=59 // pred_fallthru
          _
        %448 = sfence
        %p449 = pneg %p56
        %p450 = pneg %p53
        %s451 = sand.u32 %s69, 1
        %s452 = scalar_lea.sflag [#allocation5], %s451
        %s453 = sand.u32 %s69, 1
        %s454 = smul.addr %s453, 8
        %s455 = scalar_lea.vmem [#allocation8], %s454
        %p456 = pneg %p82
        %p457 = pneg %p79
        %p458 = pneg %p103
        %p459 = pneg %p100
        %p460 = pneg %p124
        %p461 = pneg %p121
        %p462 = pneg %p145
        %p463 = pneg %p142
        %p464 = pneg %p166
        %p465 = pneg %p163
        %p466 = pneg %p187
        %p467 = pneg %p184
        %p468 = pneg %p208
        %p469 = pneg %p205
        %p470 = pneg %p229
        %p471 = pneg %p226
        %p472 = pneg %p250
        %p473 = pneg %p247
        %p474 = pneg %p276
        %p475 = pneg %p273
        %s476 = sand.u32 %s263, 1
        %s477 = scalar_lea.sflag [#allocation6], %s476
        %s478 = sand.u32 %s263, 1
        %s479 = smul.addr %s478, 8
        %s480 = scalar_lea.vmem [#allocation17], %s479
        %v482 = vld [vmem:[%s417] sm:$0xff]
        %s483 = sld [smem:[#allocation4]]
        %s484 = sld [smem:[#allocation4 + $0x1]]
        %s485 = sld [smem:[#allocation4 + $0x2]]
        %s486 = sld [smem:[#allocation4 + $0x3]]
        %487 = vadd.xlane.f32.xlu0 %v482
        %v488 = vpop.xlane.xlu0 %487
        %v489 = vrcp.pop 128.0
        %v490 = vmul.f32 128.0, %v489
        %v491 = vsub.f32 1.0, %v490
        %v492 = vmul.f32 %v489, %v491
        %v493 = vadd.f32 %v489, %v492
        %vm494 = vweird.f32 %v489
        %v495 = vsel %vm494, %v489, %v493
        %v496 = vmul.f32 %v488, %v495
        %v497 = vsub.f32 %v482, %v496
        %v498 = vmul.f32 %v497, %v497
        %499 = vadd.xlane.f32.xlu0 %v498
        %v500 = vpop.xlane.xlu0 %499
        %v501 = vmul.f32 %v500, 0.007874016
        %v502 = vstv %s483
        %v503 = vmul.f32 %v502, %v497
        %v504 = vrsqrt.pop %v501
        %v505 = vmul.f32 %v504, %v501
        %v506 = vmul.f32 %v505, %v504
        %v507 = vmul.f32 0.5, %v506
        %v508 = vsub.f32 1.5, %v507
        %v509 = vmul.f32 %v504, %v508
        %v510 = vmul.f32 %v501, %v509
        %vm511 = vcmp.eq.f32.partialorder %v501, inf
        %v512 = vsel %vm511, %v501, %v510
        %vm513 = vcmp.eq.f32.partialorder %v501, 0.0
        %v514 = vand.u32 %v501, 2147483648
        %v515 = vsel %vm513, %v514, %v512
        %v516 = vadd.f32 %v515, 1e-06
        %v517 = vrcp.pop %v516
        %v518 = vmul.f32 %v516, %v517
        %v519 = vsub.f32 1.0, %v518
        %v520 = vmul.f32 %v517, %v519
        %v521 = vadd.f32 %v517, %v520
        %vm522 = vweird.f32 %v516
        %vm523 = vweird.f32 %v517
        %vm524 = vmor %vm522, %vm523
        %v525 = vsel %vm524, %v517, %v521
        %v526 = vand.u32 2147483647, %v516
        %vm527 = vcmp.eq.f32.partialorder %v526, 8.507059e+37
        %v528 = vand.u32 %v516, 2147483648
        %v529 = vor.u32 1.1754944e-38, %v528
        %v530 = vsel %vm527, %v529, %v525
        %v531 = vmul.f32 %v503, %v530
        %v532 = vstv %s484
        %v533 = vadd.f32 %v531, %v532
        %v534 = vpack.c.bf16 %v533, %v533
        %v535 = vld [vmem:[#allocation9] sm:$0xff]
        %v536 = vld [vmem:[#allocation9 + $0x8] sm:$0xf]
        %v537 = vld [vmem:[#allocation9 + $0xc] sm:$0xff]
        %v538 = vld [vmem:[#allocation9 + $0x14] sm:$0xf]
        %v539 = vld [vmem:[#allocation9 + $0x18] sm:$0xff]
        %v540 = vld [vmem:[#allocation9 + $0x20] sm:$0xf]
        %v541 = vld [vmem:[#allocation9 + $0x24] sm:$0xff]
        %v542 = vld [vmem:[#allocation9 + $0x2c] sm:$0xf]
        %v543 = vld [vmem:[#allocation9 + $0x30] sm:$0xff]
        %v544 = vld [vmem:[#allocation9 + $0x38] sm:$0xf]
        %v545 = vld [vmem:[#allocation9 + $0x3c] sm:$0xff]
        %v546 = vld [vmem:[#allocation9 + $0x44] sm:$0xf]
        %v547 = vld [vmem:[#allocation9 + $0x48] sm:$0xff]
        %v548 = vld [vmem:[#allocation9 + $0x50] sm:$0xf]
        %v549 = vld [vmem:[#allocation9 + $0x54] sm:$0xff]
        %v550 = vld [vmem:[#allocation9 + $0x5c] sm:$0xf]
        %v551 = vld [vmem:[#allocation9 + $0x60] sm:$0xff]
        %v552 = vld [vmem:[#allocation9 + $0x68] sm:$0xf]
        %v553 = vld [vmem:[#allocation9 + $0x6c] sm:$0xff]
        %v554 = vld [vmem:[#allocation9 + $0x74] sm:$0xf]
        %v555 = vld [vmem:[#allocation9 + $0x78] sm:$0xff]
        %v556 = vld [vmem:[#allocation9 + $0x80] sm:$0xf]
        %v557 = vld [vmem:[#allocation9 + $0x84] sm:$0xff]
        %v558 = vld [vmem:[#allocation9 + $0x8c] sm:$0xf]
        %v559 = vld [vmem:[#allocation9 + $0x90] sm:$0xff]
        %v560 = vld [vmem:[#allocation9 + $0x98] sm:$0xf]
        %v561 = vld [vmem:[#allocation9 + $0x9c] sm:$0xff]
        %v562 = vld [vmem:[#allocation9 + $0xa4] sm:$0xf]
        %v563 = vld [vmem:[#allocation9 + $0xa8] sm:$0xff]
        %v564 = vld [vmem:[#allocation9 + $0xb0] sm:$0xf]
        %v565 = vld [vmem:[#allocation9 + $0xb4] sm:$0xff]
        %v566 = vld [vmem:[#allocation9 + $0xbc] sm:$0xf]
        %v567 = vld [vmem:[%s4] sm:$0x7]
        %v569 = vperm.slane %v567, 0
        %v570 = vperm.slane %v567, 1
        %v571 = vperm.slane %v567, 2
        %v607 = vunpack.c.l.b16 %v535
        %v608 = vunpack.c.h.b16 %v535
        %v609 = vunpack.c.l.b16 %v536
        %v610 = vunpack.c.l.b16 %v537
        %v611 = vunpack.c.h.b16 %v537
        %v612 = vunpack.c.l.b16 %v538
        %v613 = vunpack.c.l.b16 %v539
        %v614 = vunpack.c.h.b16 %v539
        %v615 = vunpack.c.l.b16 %v540
        %v616 = vunpack.c.l.b16 %v541
        %v617 = vunpack.c.h.b16 %v541
        %v618 = vunpack.c.l.b16 %v542
        %v619 = vunpack.c.l.b16 %v543
        %v620 = vunpack.c.h.b16 %v543
        %v621 = vunpack.c.l.b16 %v544
        %v622 = vunpack.c.l.b16 %v545
        %v623 = vunpack.c.h.b16 %v545
        %v624 = vunpack.c.l.b16 %v546
        %v625 = vunpack.c.l.b16 %v547
        %v626 = vunpack.c.h.b16 %v547
        %v627 = vunpack.c.l.b16 %v548
        %v628 = vunpack.c.l.b16 %v549
        %v629 = vunpack.c.h.b16 %v549
        %v630 = vunpack.c.l.b16 %v550
        %v631 = vunpack.c.l.b16 %v551
        %v632 = vunpack.c.h.b16 %v551
        %v633 = vunpack.c.l.b16 %v552
        %v634 = vunpack.c.l.b16 %v553
        %v635 = vunpack.c.h.b16 %v553
        %v636 = vunpack.c.l.b16 %v554
        %v637 = vunpack.c.l.b16 %v555
        %v638 = vunpack.c.h.b16 %v555
        %v639 = vunpack.c.l.b16 %v556
        %v640 = vunpack.c.l.b16 %v557
        %v641 = vunpack.c.h.b16 %v557
        %v642 = vunpack.c.l.b16 %v558
        %v643 = vunpack.c.l.b16 %v559
        %v644 = vunpack.c.h.b16 %v559
        %v645 = vunpack.c.l.b16 %v560
        %v646 = vunpack.c.l.b16 %v561
        %v647 = vunpack.c.h.b16 %v561
        %v648 = vunpack.c.l.b16 %v562
        %v649 = vunpack.c.l.b16 %v563
        %v650 = vunpack.c.h.b16 %v563
        %v651 = vunpack.c.l.b16 %v564
        %v652 = vunpack.c.l.b16 %v565
        %v653 = vunpack.c.h.b16 %v565
        %v654 = vunpack.c.l.b16 %v566
        %v655 = vpack.c.b16 %v610, %v607
        %v656 = vpack.c.b16 %v611, %v608
        %v657 = vpack.c.b16 %v612, %v609
        %v658 = vpack.c.b16 %v616, %v613
        %v659 = vpack.c.b16 %v617, %v614
        %v660 = vpack.c.b16 %v618, %v615
        %v661 = vpack.c.b16 %v622, %v619
        %v662 = vpack.c.b16 %v623, %v620
        %v663 = vpack.c.b16 %v624, %v621
        %v664 = vpack.c.b16 %v628, %v625
        %v665 = vpack.c.b16 %v629, %v626
        %v666 = vpack.c.b16 %v630, %v627
        %v667 = vpack.c.b16 %v634, %v631
        %v668 = vpack.c.b16 %v635, %v632
        %v669 = vpack.c.b16 %v636, %v633
        %v670 = vpack.c.b16 %v640, %v637
        %v671 = vpack.c.b16 %v641, %v638
        %v672 = vpack.c.b16 %v642, %v639
        %v673 = vpack.c.b16 %v646, %v643
        %v674 = vpack.c.b16 %v647, %v644
        %v675 = vpack.c.b16 %v648, %v645
        %v676 = vpack.c.b16 %v652, %v649
        %v677 = vpack.c.b16 %v653, %v650
        %v678 = vpack.c.b16 %v654, %v651
        %703 = vmatpush.bf16.msra.mxu0 %v676
        %704 = vmatpush.bf16.msra.mxu0 %v673
        %705 = vmatpush.bf16.msra.mxu0 %v670
        %706 = vmatpush.bf16.msra.mxu0 %v667
        %707 = vmatpush.bf16.msra.mxu0 %v664
        %708 = vmatpush.bf16.msra.mxu0 %v661
        %709 = vmatpush.bf16.msra.mxu0 %v658
        %710 = vmatpush.bf16.msra.mxu0 %v655
        %711 = vmatmul.bf16.gmra.mxu0 %v534
        %v712 = vpop.f32.mrf.mxu0
        %v713 = vadd.f32 %v569, %v712
        %v714 = vpop.f32.mrf.mxu0
        %715 = vdwg.mxu0
        %716 = vmatpush.bf16.msra.mxu0 %v677
        %717 = vmatpush.bf16.msra.mxu0 %v674
        %718 = vmatpush.bf16.msra.mxu0 %v671
        %719 = vmatpush.bf16.msra.mxu0 %v668
        %720 = vmatpush.bf16.msra.mxu0 %v665
        %721 = vmatpush.bf16.msra.mxu0 %v662
        %722 = vmatpush.bf16.msra.mxu0 %v659
        %723 = vmatpush.bf16.msra.mxu0 %v656
        %724 = vmatmul.bf16.gmra.mxu0 %v534
        %v725 = vpop.f32.mrf.mxu0
        %v726 = vadd.f32 %v570, %v725
        %v727 = vpop.f32.mrf.mxu0
        %728 = vdwg.mxu0
        %729 = vmatpush.bf16.msra.mxu0 %v678
        %730 = vmatpush.bf16.msra.mxu0 %v675
        %731 = vmatpush.bf16.msra.mxu0 %v672
        %732 = vmatpush.bf16.msra.mxu0 %v669
        %733 = vmatpush.bf16.msra.mxu0 %v666
        %734 = vmatpush.bf16.msra.mxu0 %v663
        %735 = vmatpush.bf16.msra.mxu0 %v660
        %736 = vmatpush.bf16.msra.mxu0 %v657
        %737 = vmatmul.bf16.gmra.mxu0 %v534
        %v738 = vpop.f32.mrf.mxu0
        %v739 = vadd.f32 %v571, %v738
        %v740 = vpop.f32.mrf.mxu0
        %741 = vdwg.mxu0
        %v742 = vpack.c.bf16 %v713, %v713
        %v743 = vpack.c.bf16 %v726, %v726
        %v744 = vpack.c.bf16 %v739, %v739
        %s745 = sld [smem:[#allocation3 + %s40]]
        %v746 = vlaneseq
        %v747 = vand.u32 %v746, 127
        %v748 = vstv %s745
        %vm749 = vcmp.lt.s32.totalorder %v747, %v748
        %vm750 = vcmask 261120
        %v752 = vsel %vm750, %v742, 0
        %v755 = vsel %vm750, %v743, 0
        %757 = vmatpush.bf16.xpose.msra.mxu0 0
        %758 = vmatpush.bf16.xpose.msra.mxu0 0
        %759 = vmatpush.bf16.xpose.msra.mxu0 0
        %760 = vmatpush.bf16.xpose.msra.mxu0 0
        %761 = vmatpush.bf16.xpose.msra.mxu0 0
        %762 = vmatpush.bf16.xpose.msra.mxu0 0
        %763 = vmatpush.bf16.xpose.msra.mxu0 0
        %764 = vmatpush.bf16.xpose.msra.mxu0 %v755
        %765 = vmatmul.bf16.gmra.mxu0 %v752
        %v766 = vpop.f32.mrf.mxu0
        %v767 = vadd.f32 0.0, %v766
        %v768 = vpop.f32.mrf.mxu0
        %769 = vdwg.mxu0
        %v770 = vsel %vm749, %v767, -1e+09
        %vm771 = vcmask 64512
        %v772 = vsel %vm771, %v770, -inf
        %773 = vmax.xlane.f32.xlu0 %v772
        %v774 = vpop.xlane.xlu0 %773
        %v775 = vsub.f32 %v770, %v774
        %v776 = vmul.f32 %v775, 1.442695
        %v777 = vpow.pop %v776
        %v778 = vsel %vm771, %v777, 0.0
        %779 = vadd.xlane.f32.xlu0 %v778
        %v780 = vpop.xlane.xlu0 %779
        %v781 = vrcp.pop %v780
        %v782 = vmul.f32 %v780, %v781
        %v783 = vsub.f32 1.0, %v782
        %v784 = vmul.f32 %v781, %v783
        %v785 = vadd.f32 %v781, %v784
        %vm786 = vweird.f32 %v780
        %vm787 = vweird.f32 %v781
        %vm788 = vmor %vm786, %vm787
        %v789 = vsel %vm788, %v781, %v785
        %v790 = vand.u32 2147483647, %v780
        %vm791 = vcmp.eq.f32.partialorder %v790, 8.507059e+37
        %v792 = vand.u32 %v780, 2147483648
        %v793 = vor.u32 1.1754944e-38, %v792
        %v794 = vsel %vm791, %v793, %v789
        %v795 = vmul.f32 1.0, %v794
        %v796 = vmul.f32 %v777, %v795
        %v797 = vpack.c.bf16 %v796, %v796
        %v799 = vsel %vm771, %v797, 0
        %vm801 = vcmask 1043456
        %v803 = vsel %vm801, %v744, 0
        %805 = vmatpush.bf16.msra.mxu0 0
        %806 = vmatpush.bf16.msra.mxu0 0
        %807 = vmatpush.bf16.msra.mxu0 0
        %808 = vmatpush.bf16.msra.mxu0 0
        %809 = vmatpush.bf16.msra.mxu0 0
        %810 = vmatpush.bf16.msra.mxu0 0
        %811 = vmatpush.bf16.msra.mxu0 0
        %812 = vmatpush.bf16.msra.mxu0 %v803
        %813 = vmatmul.bf16.gmra.mxu0 %v799
        %v814 = vpop.f32.mrf.mxu0
        %v815 = vadd.f32 0.0, %v814
        %v816 = vpop.f32.mrf.mxu0
        %817 = vdwg.mxu0
        %v819 = vunpack.c.l.b16 %v742
        %v820 = vpack.c.b16 %v819, %v819
        %821 = vrot.lane.b32.xlu0 %v820, 96
        %v822 = vpop.permute.xlu0 %821
        %v824 = vunpack.c.l.b16 %v743
        %v825 = vpack.c.b16 %v824, %v824
        %826 = vrot.lane.b32.xlu0 %v825, 96
        %v827 = vpop.permute.xlu0 %826
        %v829 = vsel %vm750, %v822, 0
        %v832 = vsel %vm750, %v827, 0
        %834 = vmatpush.bf16.xpose.msra.mxu0 0
        %835 = vmatpush.bf16.xpose.msra.mxu0 0
        %836 = vmatpush.bf16.xpose.msra.mxu0 0
        %837 = vmatpush.bf16.xpose.msra.mxu0 0
        %838 = vmatpush.bf16.xpose.msra.mxu0 0
        %839 = vmatpush.bf16.xpose.msra.mxu0 0
        %840 = vmatpush.bf16.xpose.msra.mxu0 0
        %841 = vmatpush.bf16.xpose.msra.mxu0 %v832
        %842 = vmatmul.bf16.gmra.mxu0 %v829
        %v843 = vpop.f32.mrf.mxu0
        %v844 = vadd.f32 0.0, %v843
        %v845 = vpop.f32.mrf.mxu0
        %846 = vdwg.mxu0
        %v847 = vsel %vm749, %v844, -1e+09
        %v848 = vsel %vm771, %v847, -inf
        %849 = vmax.xlane.f32.xlu0 %v848
        %v850 = vpop.xlane.xlu0 %849
        %v851 = vsub.f32 %v847, %v850
        %v852 = vmul.f32 %v851, 1.442695
        %v853 = vpow.pop %v852
        %v854 = vsel %vm771, %v853, 0.0
        %855 = vadd.xlane.f32.xlu0 %v854
        %v856 = vpop.xlane.xlu0 %855
        %v857 = vrcp.pop %v856
        %v858 = vmul.f32 %v856, %v857
        %v859 = vsub.f32 1.0, %v858
        %v860 = vmul.f32 %v857, %v859
        %v861 = vadd.f32 %v857, %v860
        %vm862 = vweird.f32 %v856
        %vm863 = vweird.f32 %v857
        %vm864 = vmor %vm862, %vm863
        %v865 = vsel %vm864, %v857, %v861
        %v866 = vand.u32 2147483647, %v856
        %vm867 = vcmp.eq.f32.partialorder %v866, 8.507059e+37
        %v868 = vand.u32 %v856, 2147483648
        %v869 = vor.u32 1.1754944e-38, %v868
        %v870 = vsel %vm867, %v869, %v865
        %v871 = vmul.f32 1.0, %v870
        %v872 = vmul.f32 %v853, %v871
        %v873 = vpack.c.bf16 %v872, %v872
        %v875 = vunpack.c.l.b16 %v744
        %v876 = vpack.c.b16 %v875, %v875
        %877 = vrot.lane.b32.xlu0 %v876, 96
        %v878 = vpop.permute.xlu0 %877
        %v880 = vsel %vm771, %v873, 0
        %v883 = vsel %vm801, %v878, 0
        %885 = vmatpush.bf16.msra.mxu0 0
        %886 = vmatpush.bf16.msra.mxu0 0
        %887 = vmatpush.bf16.msra.mxu0 0
        %888 = vmatpush.bf16.msra.mxu0 0
        %889 = vmatpush.bf16.msra.mxu0 0
        %890 = vmatpush.bf16.msra.mxu0 0
        %891 = vmatpush.bf16.msra.mxu0 0
        %892 = vmatpush.bf16.msra.mxu0 %v883
        %893 = vmatmul.bf16.gmra.mxu0 %v880
        %v894 = vpop.f32.mrf.mxu0
        %v895 = vadd.f32 0.0, %v894
        %v896 = vpop.f32.mrf.mxu0
        %897 = vdwg.mxu0
        %898 = vrot.lane.b32.xlu0 %v820, 64
        %v899 = vpop.permute.xlu0 %898
        %900 = vrot.lane.b32.xlu0 %v825, 64
        %v901 = vpop.permute.xlu0 %900
        %v903 = vsel %vm750, %v899, 0
        %v906 = vsel %vm750, %v901, 0
        %908 = vmatpush.bf16.xpose.msra.mxu0 0
        %909 = vmatpush.bf16.xpose.msra.mxu0 0
        %910 = vmatpush.bf16.xpose.msra.mxu0 0
        %911 = vmatpush.bf16.xpose.msra.mxu0 0
        %912 = vmatpush.bf16.xpose.msra.mxu0 0
        %913 = vmatpush.bf16.xpose.msra.mxu0 0
        %914 = vmatpush.bf16.xpose.msra.mxu0 0
        %915 = vmatpush.bf16.xpose.msra.mxu0 %v906
        %916 = vmatmul.bf16.gmra.mxu0 %v903
        %v917 = vpop.f32.mrf.mxu0
        %v918 = vadd.f32 0.0, %v917
        %v919 = vpop.f32.mrf.mxu0
        %920 = vdwg.mxu0
        %v921 = vsel %vm749, %v918, -1e+09
        %v922 = vsel %vm771, %v921, -inf
        %923 = vmax.xlane.f32.xlu0 %v922
        %v924 = vpop.xlane.xlu0 %923
        %v925 = vsub.f32 %v921, %v924
        %v926 = vmul.f32 %v925, 1.442695
        %v927 = vpow.pop %v926
        %v928 = vsel %vm771, %v927, 0.0
        %929 = vadd.xlane.f32.xlu0 %v928
        %v930 = vpop.xlane.xlu0 %929
        %v931 = vrcp.pop %v930
        %v932 = vmul.f32 %v930, %v931
        %v933 = vsub.f32 1.0, %v932
        %v934 = vmul.f32 %v931, %v933
        %v935 = vadd.f32 %v931, %v934
        %vm936 = vweird.f32 %v930
        %vm937 = vweird.f32 %v931
        %vm938 = vmor %vm936, %vm937
        %v939 = vsel %vm938, %v931, %v935
        %v940 = vand.u32 2147483647, %v930
        %vm941 = vcmp.eq.f32.partialorder %v940, 8.507059e+37
        %v942 = vand.u32 %v930, 2147483648
        %v943 = vor.u32 1.1754944e-38, %v942
        %v944 = vsel %vm941, %v943, %v939
        %v945 = vmul.f32 1.0, %v944
        %v946 = vmul.f32 %v927, %v945
        %v947 = vpack.c.bf16 %v946, %v946
        %948 = vrot.lane.b32.xlu0 %v876, 64
        %v949 = vpop.permute.xlu0 %948
        %v951 = vsel %vm771, %v947, 0
        %v954 = vsel %vm801, %v949, 0
        %956 = vmatpush.bf16.msra.mxu0 0
        %957 = vmatpush.bf16.msra.mxu0 0
        %958 = vmatpush.bf16.msra.mxu0 0
        %959 = vmatpush.bf16.msra.mxu0 0
        %960 = vmatpush.bf16.msra.mxu0 0
        %961 = vmatpush.bf16.msra.mxu0 0
        %962 = vmatpush.bf16.msra.mxu0 0
        %963 = vmatpush.bf16.msra.mxu0 %v954
        %964 = vmatmul.bf16.gmra.mxu0 %v951
        %v965 = vpop.f32.mrf.mxu0
        %v966 = vadd.f32 0.0, %v965
        %v967 = vpop.f32.mrf.mxu0
        %968 = vdwg.mxu0
        %969 = vrot.lane.b32.xlu0 %v820, 32
        %v970 = vpop.permute.xlu0 %969
        %971 = vrot.lane.b32.xlu0 %v825, 32
        %v972 = vpop.permute.xlu0 %971
        %v974 = vsel %vm750, %v970, 0
        %v977 = vsel %vm750, %v972, 0
        %979 = vmatpush.bf16.xpose.msra.mxu0 0
        %980 = vmatpush.bf16.xpose.msra.mxu0 0
        %981 = vmatpush.bf16.xpose.msra.mxu0 0
        %982 = vmatpush.bf16.xpose.msra.mxu0 0
        %983 = vmatpush.bf16.xpose.msra.mxu0 0
        %984 = vmatpush.bf16.xpose.msra.mxu0 0
        %985 = vmatpush.bf16.xpose.msra.mxu0 0
        %986 = vmatpush.bf16.xpose.msra.mxu0 %v977
        %987 = vmatmul.bf16.gmra.mxu0 %v974
        %v988 = vpop.f32.mrf.mxu0
        %v989 = vadd.f32 0.0, %v988
        %v990 = vpop.f32.mrf.mxu0
        %991 = vdwg.mxu0
        %v992 = vsel %vm749, %v989, -1e+09
        %v993 = vsel %vm771, %v992, -inf
        %994 = vmax.xlane.f32.xlu0 %v993
        %v995 = vpop.xlane.xlu0 %994
        %v996 = vsub.f32 %v992, %v995
        %v997 = vmul.f32 %v996, 1.442695
        %v998 = vpow.pop %v997
        %v999 = vsel %vm771, %v998, 0.0
        %1000 = vadd.xlane.f32.xlu0 %v999
        %v1001 = vpop.xlane.xlu0 %1000
        %v1002 = vrcp.pop %v1001
        %v1003 = vmul.f32 %v1001, %v1002
        %v1004 = vsub.f32 1.0, %v1003
        %v1005 = vmul.f32 %v1002, %v1004
        %v1006 = vadd.f32 %v1002, %v1005
        %vm1007 = vweird.f32 %v1001
        %vm1008 = vweird.f32 %v1002
        %vm1009 = vmor %vm1007, %vm1008
        %v1010 = vsel %vm1009, %v1002, %v1006
        %v1011 = vand.u32 2147483647, %v1001
        %vm1012 = vcmp.eq.f32.partialorder %v1011, 8.507059e+37
        %v1013 = vand.u32 %v1001, 2147483648
        %v1014 = vor.u32 1.1754944e-38, %v1013
        %v1015 = vsel %vm1012, %v1014, %v1010
        %v1016 = vmul.f32 1.0, %v1015
        %v1017 = vmul.f32 %v998, %v1016
        %v1018 = vpack.c.bf16 %v1017, %v1017
        %1019 = vrot.lane.b32.xlu0 %v876, 32
        %v1020 = vpop.permute.xlu0 %1019
        %v1022 = vsel %vm771, %v1018, 0
        %v1025 = vsel %vm801, %v1020, 0
        %1027 = vmatpush.bf16.msra.mxu0 0
        %1028 = vmatpush.bf16.msra.mxu0 0
        %1029 = vmatpush.bf16.msra.mxu0 0
        %1030 = vmatpush.bf16.msra.mxu0 0
        %1031 = vmatpush.bf16.msra.mxu0 0
        %1032 = vmatpush.bf16.msra.mxu0 0
        %1033 = vmatpush.bf16.msra.mxu0 0
        %1034 = vmatpush.bf16.msra.mxu0 %v1025
        %1035 = vmatmul.bf16.gmra.mxu0 %v1022
        %v1036 = vpop.f32.mrf.mxu0
        %v1037 = vadd.f32 0.0, %v1036
        %v1038 = vpop.f32.mrf.mxu0
        %1039 = vdwg.mxu0
        %1041 = vrot.lane.b32.xlu0 %v895, 32
        %v1042 = vpop.permute.xlu0 %1041
        %1045 = vrot.lane.b32.xlu0 %v966, 64
        %v1046 = vpop.permute.xlu0 %1045
        %1049 = vrot.lane.b32.xlu0 %v1037, 96
        %v1050 = vpop.permute.xlu0 %1049
        %v1052 = vsel %vm750, %v815, %v1042
        %vm1053 = vcmask 523264
        %v1054 = vsel %vm1053, %v1052, %v1046
        %vm1055 = vcmask 785408
        %v1056 = vsel %vm1055, %v1054, %v1050
        %v1057 = vpack.c.bf16 %v1056, %v1056
        %v1058 = vld [vmem:[#allocation11] sm:$0xf]
        %v1059 = vld [vmem:[#allocation11 + $0x4] sm:$0xf]
        %v1060 = vld [vmem:[#allocation11 + $0x8] sm:$0xf]
        %v1061 = vld [vmem:[#allocation11 + $0xc] sm:$0xf]
        %v1062 = vld [vmem:[#allocation11 + $0x10] sm:$0xf]
        %v1063 = vld [vmem:[#allocation11 + $0x14] sm:$0xf]
        %v1064 = vld [vmem:[#allocation11 + $0x18] sm:$0xf]
        %v1065 = vld [vmem:[#allocation11 + $0x1c] sm:$0xf]
        %v1066 = vld [vmem:[#allocation11 + $0x20] sm:$0xf]
        %v1067 = vld [vmem:[#allocation11 + $0x24] sm:$0xf]
        %v1068 = vld [vmem:[#allocation11 + $0x28] sm:$0xf]
        %v1069 = vld [vmem:[#allocation11 + $0x2c] sm:$0xf]
        %v1070 = vld [vmem:[#allocation11 + $0x30] sm:$0xf]
        %v1071 = vld [vmem:[#allocation11 + $0x34] sm:$0xf]
        %v1072 = vld [vmem:[#allocation11 + $0x38] sm:$0xf]
        %v1073 = vld [vmem:[#allocation11 + $0x3c] sm:$0xf]
        %v1074 = vld [vmem:[#allocation12] sm:$0x1]
        %v1076 = vperm.slane %v1074, 0
        %v1094 = vunpack.c.l.b16 %v1058
        %v1095 = vunpack.c.l.b16 %v1059
        %v1096 = vunpack.c.l.b16 %v1060
        %v1097 = vunpack.c.l.b16 %v1061
        %v1098 = vunpack.c.l.b16 %v1062
        %v1099 = vunpack.c.l.b16 %v1063
        %v1100 = vunpack.c.l.b16 %v1064
        %v1101 = vunpack.c.l.b16 %v1065
        %v1102 = vunpack.c.l.b16 %v1066
        %v1103 = vunpack.c.l.b16 %v1067
        %v1104 = vunpack.c.l.b16 %v1068
        %v1105 = vunpack.c.l.b16 %v1069
        %v1106 = vunpack.c.l.b16 %v1070
        %v1107 = vunpack.c.l.b16 %v1071
        %v1108 = vunpack.c.l.b16 %v1072
        %v1109 = vunpack.c.l.b16 %v1073
        %v1110 = vpack.c.b16 %v1095, %v1094
        %v1111 = vpack.c.b16 %v1097, %v1096
        %v1112 = vpack.c.b16 %v1099, %v1098
        %v1113 = vpack.c.b16 %v1101, %v1100
        %v1114 = vpack.c.b16 %v1103, %v1102
        %v1115 = vpack.c.b16 %v1105, %v1104
        %v1116 = vpack.c.b16 %v1107, %v1106
        %v1117 = vpack.c.b16 %v1109, %v1108
        %1126 = vmatpush.bf16.msra.mxu0 %v1117
        %1127 = vmatpush.bf16.msra.mxu0 %v1116
        %1128 = vmatpush.bf16.msra.mxu0 %v1115
        %1129 = vmatpush.bf16.msra.mxu0 %v1114
        %1130 = vmatpush.bf16.msra.mxu0 %v1113
        %1131 = vmatpush.bf16.msra.mxu0 %v1112
        %1132 = vmatpush.bf16.msra.mxu0 %v1111
        %1133 = vmatpush.bf16.msra.mxu0 %v1110
        %1134 = vmatmul.bf16.gmra.mxu0 %v1057
        %v1135 = vpop.f32.mrf.mxu0
        %v1136 = vadd.f32 %v1076, %v1135
        %v1137 = vpop.f32.mrf.mxu0
        %1138 = vdwg.mxu0
        %v1139 = vadd.f32 %v482, %v1136
        %1140 = vadd.xlane.f32.xlu0 %v1139
        %v1141 = vpop.xlane.xlu0 %1140
        %v1142 = vmul.f32 %v1141, %v495
        %v1143 = vsub.f32 %v1139, %v1142
        %v1144 = vmul.f32 %v1143, %v1143
        %1145 = vadd.xlane.f32.xlu0 %v1144
        %v1146 = vpop.xlane.xlu0 %1145
        %v1147 = vmul.f32 %v1146, 0.007874016
        %v1148 = vstv %s485
        %v1149 = vmul.f32 %v1148, %v1143
        %v1150 = vrsqrt.pop %v1147
        %v1151 = vmul.f32 %v1150, %v1147
        %v1152 = vmul.f32 %v1151, %v1150
        %v1153 = vmul.f32 0.5, %v1152
        %v1154 = vsub.f32 1.5, %v1153
        %v1155 = vmul.f32 %v1150, %v1154
        %v1156 = vmul.f32 %v1147, %v1155
        %vm1157 = vcmp.eq.f32.partialorder %v1147, inf
        %v1158 = vsel %vm1157, %v1147, %v1156
        %vm1159 = vcmp.eq.f32.partialorder %v1147, 0.0
        %v1160 = vand.u32 %v1147, 2147483648
        %v1161 = vsel %vm1159, %v1160, %v1158
        %v1162 = vadd.f32 %v1161, 1e-06
        %v1163 = vrcp.pop %v1162
        %v1164 = vmul.f32 %v1162, %v1163
        %v1165 = vsub.f32 1.0, %v1164
        %v1166 = vmul.f32 %v1163, %v1165
        %v1167 = vadd.f32 %v1163, %v1166
        %vm1168 = vweird.f32 %v1162
        %vm1169 = vweird.f32 %v1163
        %vm1170 = vmor %vm1168, %vm1169
        %v1171 = vsel %vm1170, %v1163, %v1167
        %v1172 = vand.u32 2147483647, %v1162
        %vm1173 = vcmp.eq.f32.partialorder %v1172, 8.507059e+37
        %v1174 = vand.u32 %v1162, 2147483648
        %v1175 = vor.u32 1.1754944e-38, %v1174
        %v1176 = vsel %vm1173, %v1175, %v1171
        %v1177 = vmul.f32 %v1149, %v1176
        %v1178 = vstv %s486
        %v1179 = vadd.f32 %v1177, %v1178
        %v1180 = vpack.c.bf16 %v1179, %v1179
        %v1181 = vld [vmem:[#allocation14] sm:$0xff]
        %v1182 = vld [vmem:[#allocation14 + $0x8] sm:$0xff]
        %v1183 = vld [vmem:[#allocation14 + $0x10] sm:$0xff]
        %v1184 = vld [vmem:[#allocation14 + $0x18] sm:$0xff]
        %v1185 = vld [vmem:[#allocation14 + $0x20] sm:$0xff]
        %v1186 = vld [vmem:[#allocation14 + $0x28] sm:$0xff]
        %v1187 = vld [vmem:[#allocation14 + $0x30] sm:$0xff]
        %v1188 = vld [vmem:[#allocation14 + $0x38] sm:$0xff]
        %v1189 = vld [vmem:[#allocation14 + $0x40] sm:$0xff]
        %v1190 = vld [vmem:[#allocation14 + $0x48] sm:$0xff]
        %v1191 = vld [vmem:[#allocation14 + $0x50] sm:$0xff]
        %v1192 = vld [vmem:[#allocation14 + $0x58] sm:$0xff]
        %v1193 = vld [vmem:[#allocation14 + $0x60] sm:$0xff]
        %v1194 = vld [vmem:[#allocation14 + $0x68] sm:$0xff]
        %v1195 = vld [vmem:[#allocation14 + $0x70] sm:$0xff]
        %v1196 = vld [vmem:[#allocation14 + $0x78] sm:$0xff]
        %v1197 = vld [vmem:[%s8] sm:$0x3]
        %v1199 = vperm.slane %v1197, 0
        %v1200 = vperm.slane %v1197, 1
        %v1219 = vunpack.c.l.b16 %v1181
        %v1220 = vunpack.c.h.b16 %v1181
        %v1221 = vunpack.c.l.b16 %v1182
        %v1222 = vunpack.c.h.b16 %v1182
        %v1223 = vunpack.c.l.b16 %v1183
        %v1224 = vunpack.c.h.b16 %v1183
        %v1225 = vunpack.c.l.b16 %v1184
        %v1226 = vunpack.c.h.b16 %v1184
        %v1227 = vunpack.c.l.b16 %v1185
        %v1228 = vunpack.c.h.b16 %v1185
        %v1229 = vunpack.c.l.b16 %v1186
        %v1230 = vunpack.c.h.b16 %v1186
        %v1231 = vunpack.c.l.b16 %v1187
        %v1232 = vunpack.c.h.b16 %v1187
        %v1233 = vunpack.c.l.b16 %v1188
        %v1234 = vunpack.c.h.b16 %v1188
        %v1235 = vunpack.c.l.b16 %v1189
        %v1236 = vunpack.c.h.b16 %v1189
        %v1237 = vunpack.c.l.b16 %v1190
        %v1238 = vunpack.c.h.b16 %v1190
        %v1239 = vunpack.c.l.b16 %v1191
        %v1240 = vunpack.c.h.b16 %v1191
        %v1241 = vunpack.c.l.b16 %v1192
        %v1242 = vunpack.c.h.b16 %v1192
        %v1243 = vunpack.c.l.b16 %v1193
        %v1244 = vunpack.c.h.b16 %v1193
        %v1245 = vunpack.c.l.b16 %v1194
        %v1246 = vunpack.c.h.b16 %v1194
        %v1247 = vunpack.c.l.b16 %v1195
        %v1248 = vunpack.c.h.b16 %v1195
        %v1249 = vunpack.c.l.b16 %v1196
        %v1250 = vunpack.c.h.b16 %v1196
        %v1251 = vpack.c.b16 %v1221, %v1219
        %v1252 = vpack.c.b16 %v1222, %v1220
        %v1253 = vpack.c.b16 %v1225, %v1223
        %v1254 = vpack.c.b16 %v1226, %v1224
        %v1255 = vpack.c.b16 %v1229, %v1227
        %v1256 = vpack.c.b16 %v1230, %v1228
        %v1257 = vpack.c.b16 %v1233, %v1231
        %v1258 = vpack.c.b16 %v1234, %v1232
        %v1259 = vpack.c.b16 %v1237, %v1235
        %v1260 = vpack.c.b16 %v1238, %v1236
        %v1261 = vpack.c.b16 %v1241, %v1239
        %v1262 = vpack.c.b16 %v1242, %v1240
        %v1263 = vpack.c.b16 %v1245, %v1243
        %v1264 = vpack.c.b16 %v1246, %v1244
        %v1265 = vpack.c.b16 %v1249, %v1247
        %v1266 = vpack.c.b16 %v1250, %v1248
        %1283 = vmatpush.bf16.msra.mxu0 %v1265
        %1284 = vmatpush.bf16.msra.mxu0 %v1263
        %1285 = vmatpush.bf16.msra.mxu0 %v1261
        %1286 = vmatpush.bf16.msra.mxu0 %v1259
        %1287 = vmatpush.bf16.msra.mxu0 %v1257
        %1288 = vmatpush.bf16.msra.mxu0 %v1255
        %1289 = vmatpush.bf16.msra.mxu0 %v1253
        %1290 = vmatpush.bf16.msra.mxu0 %v1251
        %1291 = vmatmul.bf16.gmra.mxu0 %v1180
        %v1292 = vpop.f32.mrf.mxu0
        %v1293 = vadd.f32 %v1199, %v1292
        %v1294 = vpop.f32.mrf.mxu0
        %1295 = vdwg.mxu0
        %1296 = vmatpush.bf16.msra.mxu0 %v1266
        %1297 = vmatpush.bf16.msra.mxu0 %v1264
        %1298 = vmatpush.bf16.msra.mxu0 %v1262
        %1299 = vmatpush.bf16.msra.mxu0 %v1260
        %1300 = vmatpush.bf16.msra.mxu0 %v1258
        %1301 = vmatpush.bf16.msra.mxu0 %v1256
        %1302 = vmatpush.bf16.msra.mxu0 %v1254
        %1303 = vmatpush.bf16.msra.mxu0 %v1252
        %1304 = vmatmul.bf16.gmra.mxu0 %v1180
        %v1305 = vpop.f32.mrf.mxu0
        %v1306 = vadd.f32 %v1200, %v1305
        %v1307 = vpop.f32.mrf.mxu0
        %1308 = vdwg.mxu0
        %v1309 = vmax.f32 %v1293, 0.0
        %v1310 = vmax.f32 %v1306, 0.0
        %v1311 = vpack.c.bf16 %v1309, %v1309
        %v1312 = vpack.c.bf16 %v1310, %v1310
        %v1313 = vld [vmem:[#allocation15] sm:$0xf]
        %v1314 = vld [vmem:[#allocation15 + $0x4] sm:$0xf]
        %v1315 = vld [vmem:[#allocation15 + $0x8] sm:$0xf]
        %v1316 = vld [vmem:[#allocation15 + $0xc] sm:$0xf]
        %v1317 = vld [vmem:[#allocation15 + $0x10] sm:$0xf]
        %v1318 = vld [vmem:[#allocation15 + $0x14] sm:$0xf]
        %v1319 = vld [vmem:[#allocation15 + $0x18] sm:$0xf]
        %v1320 = vld [vmem:[#allocation15 + $0x1c] sm:$0xf]
        %v1321 = vld [vmem:[#allocation15 + $0x20] sm:$0xf]
        %v1322 = vld [vmem:[#allocation15 + $0x24] sm:$0xf]
        %v1323 = vld [vmem:[#allocation15 + $0x28] sm:$0xf]
        %v1324 = vld [vmem:[#allocation15 + $0x2c] sm:$0xf]
        %v1325 = vld [vmem:[#allocation15 + $0x30] sm:$0xf]
        %v1326 = vld [vmem:[#allocation15 + $0x34] sm:$0xf]
        %v1327 = vld [vmem:[#allocation15 + $0x38] sm:$0xf]
        %v1328 = vld [vmem:[#allocation15 + $0x3c] sm:$0xf]
        %v1329 = vld [vmem:[#allocation15 + $0x40] sm:$0xf]
        %v1330 = vld [vmem:[#allocation15 + $0x44] sm:$0xf]
        %v1331 = vld [vmem:[#allocation15 + $0x48] sm:$0xf]
        %v1332 = vld [vmem:[#allocation15 + $0x4c] sm:$0xf]
        %v1333 = vld [vmem:[#allocation15 + $0x50] sm:$0xf]
        %v1334 = vld [vmem:[#allocation15 + $0x54] sm:$0xf]
        %v1335 = vld [vmem:[#allocation15 + $0x58] sm:$0xf]
        %v1336 = vld [vmem:[#allocation15 + $0x5c] sm:$0xf]
        %v1337 = vld [vmem:[#allocation15 + $0x60] sm:$0xf]
        %v1338 = vld [vmem:[#allocation15 + $0x64] sm:$0xf]
        %v1339 = vld [vmem:[#allocation15 + $0x68] sm:$0xf]
        %v1340 = vld [vmem:[#allocation15 + $0x6c] sm:$0xf]
        %v1341 = vld [vmem:[#allocation15 + $0x70] sm:$0xf]
        %v1342 = vld [vmem:[#allocation15 + $0x74] sm:$0xf]
        %v1343 = vld [vmem:[#allocation15 + $0x78] sm:$0xf]
        %v1344 = vld [vmem:[#allocation15 + $0x7c] sm:$0xf]
        %v1345 = vld [vmem:[%s10] sm:$0x1]
        %v1347 = vperm.slane %v1345, 0
        %v1381 = vunpack.c.l.b16 %v1313
        %v1382 = vunpack.c.l.b16 %v1314
        %v1383 = vunpack.c.l.b16 %v1315
        %v1384 = vunpack.c.l.b16 %v1316
        %v1385 = vunpack.c.l.b16 %v1317
        %v1386 = vunpack.c.l.b16 %v1318
        %v1387 = vunpack.c.l.b16 %v1319
        %v1388 = vunpack.c.l.b16 %v1320
        %v1389 = vunpack.c.l.b16 %v1321
        %v1390 = vunpack.c.l.b16 %v1322
        %v1391 = vunpack.c.l.b16 %v1323
        %v1392 = vunpack.c.l.b16 %v1324
        %v1393 = vunpack.c.l.b16 %v1325
        %v1394 = vunpack.c.l.b16 %v1326
        %v1395 = vunpack.c.l.b16 %v1327
        %v1396 = vunpack.c.l.b16 %v1328
        %v1397 = vunpack.c.l.b16 %v1329
        %v1398 = vunpack.c.l.b16 %v1330
        %v1399 = vunpack.c.l.b16 %v1331
        %v1400 = vunpack.c.l.b16 %v1332
        %v1401 = vunpack.c.l.b16 %v1333
        %v1402 = vunpack.c.l.b16 %v1334
        %v1403 = vunpack.c.l.b16 %v1335
        %v1404 = vunpack.c.l.b16 %v1336
        %v1405 = vunpack.c.l.b16 %v1337
        %v1406 = vunpack.c.l.b16 %v1338
        %v1407 = vunpack.c.l.b16 %v1339
        %v1408 = vunpack.c.l.b16 %v1340
        %v1409 = vunpack.c.l.b16 %v1341
        %v1410 = vunpack.c.l.b16 %v1342
        %v1411 = vunpack.c.l.b16 %v1343
        %v1412 = vunpack.c.l.b16 %v1344
        %v1413 = vpack.c.b16 %v1382, %v1381
        %v1414 = vpack.c.b16 %v1384, %v1383
        %v1415 = vpack.c.b16 %v1386, %v1385
        %v1416 = vpack.c.b16 %v1388, %v1387
        %v1417 = vpack.c.b16 %v1390, %v1389
        %v1418 = vpack.c.b16 %v1392, %v1391
        %v1419 = vpack.c.b16 %v1394, %v1393
        %v1420 = vpack.c.b16 %v1396, %v1395
        %v1421 = vpack.c.b16 %v1398, %v1397
        %v1422 = vpack.c.b16 %v1400, %v1399
        %v1423 = vpack.c.b16 %v1402, %v1401
        %v1424 = vpack.c.b16 %v1404, %v1403
        %v1425 = vpack.c.b16 %v1406, %v1405
        %v1426 = vpack.c.b16 %v1408, %v1407
        %v1427 = vpack.c.b16 %v1410, %v1409
        %v1428 = vpack.c.b16 %v1412, %v1411
        %1445 = vmatpush.bf16.msra.mxu0 %v1420
        %1446 = vmatpush.bf16.msra.mxu0 %v1419
        %1447 = vmatpush.bf16.msra.mxu0 %v1418
        %1448 = vmatpush.bf16.msra.mxu0 %v1417
        %1449 = vmatpush.bf16.msra.mxu0 %v1416
        %1450 = vmatpush.bf16.msra.mxu0 %v1415
        %1451 = vmatpush.bf16.msra.mxu0 %v1414
        %1452 = vmatpush.bf16.msra.mxu0 %v1413
        %1453 = vmatmul.bf16.gmra.mxu0 %v1311
        %v1454 = vpop.f32.mrf.mxu0
        %v1455 = vadd.f32 %v1347, %v1454
        %v1456 = vpop.f32.mrf.mxu0
        %1457 = vdwg.mxu0
        %1458 = vmatpush.bf16.msra.mxu0 %v1428
        %1459 = vmatpush.bf16.msra.mxu0 %v1427
        %1460 = vmatpush.bf16.msra.mxu0 %v1426
        %1461 = vmatpush.bf16.msra.mxu0 %v1425
        %1462 = vmatpush.bf16.msra.mxu0 %v1424
        %1463 = vmatpush.bf16.msra.mxu0 %v1423
        %1464 = vmatpush.bf16.msra.mxu0 %v1422
        %1465 = vmatpush.bf16.msra.mxu0 %v1421
        %1466 = vmatmul.bf16.gmra.mxu0 %v1312
        %v1467 = vpop.f32.mrf.mxu0
        %v1468 = vadd.f32 %v1455, %v1467
        %v1469 = vpop.f32.mrf.mxu0
        %1470 = vdwg.mxu0
        %v1471 = vadd.f32 %v1139, %v1468
        %1472 = vst [vmem:[%s480] sm:$0xff] %v1471
        %s1473 = sand.u32 %s263, 1
        %s1474 = scalar_lea.sflag [#allocation6], %s1473
        %s1475 = sand.u32 %s263, 1
        %s1476 = smul.addr %s1475, 8
        %s1477 = scalar_lea.vmem [#allocation17], %s1476
        // Predicated region
        $region89: #{tpu_custom_call.1} parent=59 // pred_check
          %p1478 = pneg %p273
        $region90: #{tpu_custom_call.1} parent=59 // pred_check_branch
          %1480 = sbr.rel (%p1478) target = $region92
        $region91: #{tpu_custom_call.1} parent=59 // pred_region
          %1482 = vsyncadd %s1474, 0
          %s1483 = smul.addr %s40, 8
          %s1484 = scalar_lea.hbm %s11, %s1483
          %s1486 = sshll.u32 %s1477, 4
          %s1487 = int_to_ptr.vmem [resolvable:$true] %s1486
          %s1488 = sshll.u32 %s1484, 4
          %s1489 = int_to_ptr.hbm [resolvable:$true] %s1488
          %1491 = dma.vmem_to_hbm [thread:$0]  %s1487, 128, %s1489, %s1474
        $region92: #{tpu_custom_call.1} parent=59 // pred_fallthru
          _
      $region60: #{tpu_custom_call.1} parent=5 // pred_fallthru
        _
      %p1492 = scmp.le.s32.totalorder 2, %s35
      // Predicated region
      $region93: #{tpu_custom_call.1} parent=5 // pred_check
        %p1493 = pneg %p1492
      $region94: #{tpu_custom_call.1} parent=5 // pred_check_branch
        %1495 = sbr.rel (%p1493) target = $region96
      $region95: #{tpu_custom_call.1} parent=5 // pred_region
        %s1496 = ssub.s32 %s35, 2
        // Predicated region
        $region97: #{tpu_custom_call.1} parent=95 // pred_check
          %p1497 = pneg %p279
        $region98: #{tpu_custom_call.1} parent=95 // pred_check_branch
          %1499 = sbr.rel (%p1497) target = $region100
        $region99: #{tpu_custom_call.1} parent=95 // pred_region
          %s1500 = sand.u32 %s264, 1
          %s1501 = scalar_lea.sflag [#allocation6], %s1500
          %s1502 = sand.u32 %s264, 1
          %s1503 = smul.addr %s1502, 8
          %s1504 = scalar_lea.vmem [#allocation17], %s1503
          %1506 = dma.done %s1501, 128
        $region100: #{tpu_custom_call.1} parent=95 // pred_fallthru
          _
      $region96: #{tpu_custom_call.1} parent=5 // pred_fallthru
        _
    $region6: #{tpu_custom_call.1} parent=1 // loop_footer
      %s39 = sadd.s32 1, %s35
    $region7: #{tpu_custom_call.1} parent=1 // loop_footer_branch
      %34 = sbr.rel target = $region3
    $region8: #{tpu_custom_call.1} parent=1 // loop_exit
      _
    %1507 = vsyncpa [#allocation5], 1
    %s1508 = scalar_lea.sflag [#allocation5], 1
    %1509 = vsyncpa %s1508, 1
    %1510 = vsyncpa [#allocation10], 1
    %1511 = vsyncpa [#allocation13], 1
    %1512 = vsyncpa [#allocation16], 1
    %1513 = vsyncpa [#allocation6], 1
    %s1514 = scalar_lea.sflag [#allocation6], 1
    %1515 = vsyncpa %s1514, 1
    %1516 = vsyncpa [#allocation7], 1
    %s1517 = scalar_lea.sflag [#allocation7], 1
    %1518 = vsyncpa %s1517, 1

</llo_original>
